<compile_context>
chip_gen: v5e
topology: v5e:2x2
jax: 0.10.0
libtpu: 0.0.40
codegen_flags: <defaults>
</compile_context>

<pallas_src>
from functools import partial

import numpy as np
import jax
import jax.numpy as jnp
from jax.experimental import pallas as pl
from jax.experimental.pallas import tpu as pltpu


# ---------------------------------------------------------------------------
# Fused Pallas kernel
# ---------------------------------------------------------------------------
def _fused_forward_kernel(k1, wp1, wd1, cin_p, k2, wp2, wd2, cin2,
                          thr_ref, x_ref, w1_ref, w2_ref, s1_ref, s2_ref,
                          out_ref, slab1_ref, slab2_ref):
    t1 = thr_ref[0]
    t2 = thr_ref[1]

    # ---- conv1 as ONE MXU matmul: implicit-im2col slab in VMEM scratch.
    xf = x_ref[0]                                             # [cin_p, XW] bf16
    for di in range(k1):
        for dj in range(k1):
            idx = di * k1 + dj
            sh = di * wp1 + dj
            # tile-aligned sublane store (cin_p is a multiple of 16)
            slab1_ref[idx * cin_p:(idx + 1) * cin_p, :] = xf[:, sh:sh + wd1]
    pot1 = jnp.dot(w1_ref[...], slab1_ref[...],
                   preferred_element_type=jnp.float32)        # [cout1, W1] f32
    spk1 = (pot1 > t1).astype(jnp.bfloat16)                   # sf.fire -> {0,1}

    # ---- sf.pooling(2,2,1) + sf.pad(1,1,1,1): for binary spikes max-pool ==
    #      (0/1 sum-pool matrix matmul > 0); s1 also drops garbage columns and
    #      re-embeds the pooled map, zero-padded, in conv2's flat layout.
    y = (jnp.dot(spk1, s1_ref[...], preferred_element_type=jnp.float32)
         > 0.5).astype(jnp.bfloat16)                          # [cout1, YW]

    # ---- conv2 as ONE MXU matmul (K = k2*k2*cin2 = 128).
    for di in range(k2):
        for dj in range(k2):
            idx = di * k2 + dj
            sh = di * wp2 + dj
            slab2_ref[idx * cin2:(idx + 1) * cin2, :] = y[:, sh:sh + wd2]
    pot2 = jnp.dot(w2_ref[...], slab2_ref[...],
                   preferred_element_type=jnp.float32)        # [cout2, W2] f32
    spk2 = (pot2 > t2).astype(jnp.bfloat16)

    # ---- final sf.pooling(2,2,1): lane-dense store (OUTW = 128).
    out_ref[0] = (jnp.dot(spk2, s2_ref[...], preferred_element_type=jnp.float32)
                  > 0.5).astype(jnp.float32)


# ---------------------------------------------------------------------------
# Host-side constants (shape-dependent only)
# ---------------------------------------------------------------------------
def _round_up(a, m):
    return -(-a // m) * m


def _sum_pool_matrix(in_rows, in_grid_w, valid_h, valid_w,
                     out_cols, out_grid_w, out_off):
    """0/1 matrix mapping a flat spike map (rows = flat positions on an
    in_grid_w-wide grid, valid region valid_h x valid_w) to its
    max_pool2d(k=2, s=2, p=1) *sum*-pooled map, embedded with border offset
    out_off on an out_grid_w-wide flat grid, padded to out_cols columns."""
    ph, pw = valid_h // 2 + 1, valid_w // 2 + 1
    s = np.zeros((in_rows, out_cols), np.float32)
    for io in range(ph):
        for jo in range(pw):
            q = (io + out_off) * out_grid_w + (jo + out_off)
            for ii in (2 * io - 1, 2 * io):
                if not (0 <= ii < valid_h):
                    continue
                for jj in (2 * jo - 1, 2 * jo):
                    if not (0 <= jj < valid_w):
                        continue
                    s[ii * in_grid_w + jj, q] = 1.0
    return s


# ---------------------------------------------------------------------------
# Wrapper (layout plumbing only)
# ---------------------------------------------------------------------------
def kheradpisheh_forward(x_nchw, w1, w2, conv1_t=10.0, conv2_t=1.0):
    """Eval-mode forward of KheradpishehMNIST.

    x_nchw: [N, 2, H, W] spike wave (time-steps as batch) -> [N, 150, Ho, Wo]
    w1: [32, 2, 5, 5], w2: [150, 32, 2, 2] (PyTorch conv weight layout).
    """
    n, cin, h, w = x_nchw.shape
    cout1, _, k1, _ = w1.shape
    cout2, cin2, k2, _ = w2.shape

    # ---- shapes along the module's eval forward ----
    hp, wp = h + 4, w + 4                        # sf.pad(2,2,2,2)
    ho1, wo1 = hp - k1 + 1, wp - k1 + 1          # conv1 valid output
    ph1, pw1 = ho1 // 2 + 1, wo1 // 2 + 1        # sf.pooling(2,2,1)
    h2, w2g = ph1 + 2, pw1 + 2                   # + sf.pad(1,1,1,1)
    ho2, wo2 = h2 - k2 + 1, w2g - k2 + 1         # conv2 valid output
    ph2, pw2 = ho2 // 2 + 1, wo2 // 2 + 1        # final pooling

    # ---- lane-aligned flat widths (garbage columns dropped by s1/s2) ----
    cin_p = _round_up(max(cin, 16), 16)          # bf16-tile-aligned slab pieces
    W1 = _round_up((ho1 - 1) * wp + wo1, 128)    # conv1 compute width (covers valid pos)
    XW = _round_up(W1 + (k1 - 1) * wp + (k1 - 1), 128)   # + shift margin
    W2 = _round_up((ho2 - 1) * w2g + wo2, 128)   # conv2 compute width
    YW = _round_up(W2 + (k2 - 1) * w2g + (k2 - 1), 128)  # conv2 input width
    OUTW = _round_up(ph2 * pw2, 128)             # lane-dense output width
    assert cin2 % 16 == 0                        # aligned conv2 slab pieces (cin2 = 32)

    # ---- one-time layout plumbing in XLA (lane-dense, bf16 operands) ----
    x = x_nchw.astype(jnp.float32)               # input spikes are {0,1}: exact in bf16
    x = jnp.pad(x, ((0, 0), (0, 0), (2, 2), (2, 2))).reshape(n, cin, hp * wp)
    x = jnp.pad(x, ((0, 0), (0, cin_p - cin), (0, XW - hp * wp))).astype(jnp.bfloat16)

    w1p = jnp.pad(w1.astype(jnp.float32), ((0, 0), (0, cin_p - cin), (0, 0), (0, 0)))
    w1r = jnp.transpose(w1p, (0, 2, 3, 1)).reshape(cout1, k1 * k1 * cin_p).astype(jnp.bfloat16)
    w2r = jnp.transpose(w2.astype(jnp.float32), (0, 2, 3, 1)).reshape(
        cout2, k2 * k2 * cin2).astype(jnp.bfloat16)

    thr = jnp.array([conv1_t, conv2_t], jnp.float32)
    s1 = jnp.asarray(_sum_pool_matrix(W1, wp, ho1, wo1, YW, w2g, 1), jnp.bfloat16)
    s2 = jnp.asarray(_sum_pool_matrix(W2, w2g, ho2, wo2, OUTW, pw2, 0), jnp.bfloat16)

    out = pl.pallas_call(
        partial(_fused_forward_kernel, k1, wp, W1, cin_p, k2, w2g, W2, cin2),
        grid=(n,),
        in_specs=[
            pl.BlockSpec(memory_space=pltpu.MemorySpace.SMEM),             # thresholds
            pl.BlockSpec((1, cin_p, XW), lambda i: (i, 0, 0)),             # x (per step)
            pl.BlockSpec((cout1, k1 * k1 * cin_p), lambda i: (0, 0)),      # conv1 weights
            pl.BlockSpec((cout2, k2 * k2 * cin2), lambda i: (0, 0)),       # conv2 weights
            pl.BlockSpec((W1, YW), lambda i: (0, 0)),                      # pool1(+pad) matrix
            pl.BlockSpec((W2, OUTW), lambda i: (0, 0)),                    # pool2 matrix
        ],
        out_specs=pl.BlockSpec((1, cout2, OUTW), lambda i: (i, 0, 0)),
        out_shape=jax.ShapeDtypeStruct((n, cout2, OUTW), jnp.float32),
        scratch_shapes=[
            pltpu.VMEM((k1 * k1 * cin_p, W1), jnp.bfloat16),               # conv1 im2col slab
            pltpu.VMEM((k2 * k2 * cin2, W2), jnp.bfloat16),                # conv2 im2col slab
        ],
        compiler_params=pltpu.CompilerParams(
            dimension_semantics=("parallel",)),
    )(thr, x, w1r, w2r, s1, s2)

    return out[:, :, :ph2 * pw2].reshape(n, cout2, ph2, pw2)               # NCHW


if __name__ == "__main__":
    key = jax.random.PRNGKey(0)
    k_in, k_w1, k_w2 = jax.random.split(key, 3)

    # Input: small spike wave [time=2, channels=2, 16, 16] (binary spikes).
    x = (jax.random.uniform(k_in, (2, 2, 16, 16)) < 0.5).astype(jnp.float32)

    # snn.Convolution weights: normal(mean=0.8, std=0.05), no bias.
    w1 = 0.8 + 0.05 * jax.random.normal(k_w1, (32, 2, 5, 5), jnp.float32)
    w2 = 0.8 + 0.05 * jax.random.normal(k_w2, (150, 32, 2, 2), jnp.float32)

    out = jax.jit(kheradpisheh_forward)(x, w1, w2)
    jax.block_until_ready(out)
    assert out.shape == (2, 150, 6, 6), out.shape
    assert out.dtype == jnp.float32
    print("KERNEL_OK")
</pallas_src>

<mosaic_0001>
module attributes {stable_mosaic.version = 11 : i64} {
  func.func @_fused_forward_kernel(%arg0: i32, %arg1: memref<2xf32, #tpu.memory_space<smem>>, %arg2: memref<1x16x512xbf16, #tpu.memory_space<vmem>>, %arg3: memref<32x400xbf16, #tpu.memory_space<vmem>>, %arg4: memref<150x128xbf16, #tpu.memory_space<vmem>>, %arg5: memref<384x256xbf16, #tpu.memory_space<vmem>>, %arg6: memref<128x128xbf16, #tpu.memory_space<vmem>>, %arg7: memref<1x150x128xf32, #tpu.memory_space<vmem>>, %arg8: memref<400x384xbf16, #tpu.memory_space<vmem>>, %arg9: memref<128x128xbf16, #tpu.memory_space<vmem>>) attributes {dimension_semantics = [#tpu.dimension_semantics<parallel>], iteration_bounds = array<i64: 2>, scalar_prefetch = 0 : i64, scratch_operands = 2 : i64, tpu.core_type = #tpu.core_type<tc>, window_params = [{transform_indices = @transform_0, window_bounds = array<i64: 2>}, {transform_indices = @transform_1, window_bounds = array<i64: 1, 16, 512>}, {pipeline_mode = #tpu.pipeline_mode<synchronous>, transform_indices = @transform_2, window_bounds = array<i64: 32, 400>}, {pipeline_mode = #tpu.pipeline_mode<synchronous>, transform_indices = @transform_3, window_bounds = array<i64: 150, 128>}, {pipeline_mode = #tpu.pipeline_mode<synchronous>, transform_indices = @transform_4, window_bounds = array<i64: 384, 256>}, {pipeline_mode = #tpu.pipeline_mode<synchronous>, transform_indices = @transform_5, window_bounds = array<i64: 128, 128>}, {transform_indices = @transform_6, window_bounds = array<i64: 1, 150, 128>}]} {
    %c0 = arith.constant 0 : index
    %0 = memref.load %arg1[%c0] : memref<2xf32, #tpu.memory_space<smem>>
    %c1 = arith.constant 1 : index
    %1 = memref.load %arg1[%c1] : memref<2xf32, #tpu.memory_space<smem>>
    %c0_0 = arith.constant 0 : index
    %c0_1 = arith.constant 0 : index
    %c0_2 = arith.constant 0 : index
    %2 = vector.load %arg2[%c0_0, %c0_1, %c0_2] : memref<1x16x512xbf16, #tpu.memory_space<vmem>>, vector<1x16x512xbf16>
    %3 = vector.shape_cast %2 : vector<1x16x512xbf16> to vector<16x512xbf16>
    %4 = vector.extract_strided_slice %3 {offsets = [0, 0], sizes = [16, 384], strides = [1, 1]} : vector<16x512xbf16> to vector<16x384xbf16>
    %c0_3 = arith.constant 0 : index
    %c0_4 = arith.constant 0 : index
    %5 = vector.load %arg8[%c0_3, %c0_4] : memref<400x384xbf16, #tpu.memory_space<vmem>>, vector<16x384xbf16>
    tpu.vector_store %arg8[%c0_3, %c0_4], %4 {strides = array<i32>} : memref<400x384xbf16, #tpu.memory_space<vmem>>, vector<16x384xbf16>,
    %6 = vector.extract_strided_slice %3 {offsets = [0, 1], sizes = [16, 384], strides = [1, 1]} : vector<16x512xbf16> to vector<16x384xbf16>
    %c16 = arith.constant 16 : index
    %c0_5 = arith.constant 0 : index
    %7 = vector.load %arg8[%c16, %c0_5] : memref<400x384xbf16, #tpu.memory_space<vmem>>, vector<16x384xbf16>
    tpu.vector_store %arg8[%c16, %c0_5], %6 {strides = array<i32>} : memref<400x384xbf16, #tpu.memory_space<vmem>>, vector<16x384xbf16>,
    %8 = vector.extract_strided_slice %3 {offsets = [0, 2], sizes = [16, 384], strides = [1, 1]} : vector<16x512xbf16> to vector<16x384xbf16>
    %c32 = arith.constant 32 : index
    %c0_6 = arith.constant 0 : index
    %9 = vector.load %arg8[%c32, %c0_6] : memref<400x384xbf16, #tpu.memory_space<vmem>>, vector<16x384xbf16>
    tpu.vector_store %arg8[%c32, %c0_6], %8 {strides = array<i32>} : memref<400x384xbf16, #tpu.memory_space<vmem>>, vector<16x384xbf16>,
    %10 = vector.extract_strided_slice %3 {offsets = [0, 3], sizes = [16, 384], strides = [1, 1]} : vector<16x512xbf16> to vector<16x384xbf16>
    %c48 = arith.constant 48 : index
    %c0_7 = arith.constant 0 : index
    %11 = vector.load %arg8[%c48, %c0_7] : memref<400x384xbf16, #tpu.memory_space<vmem>>, vector<16x384xbf16>
    tpu.vector_store %arg8[%c48, %c0_7], %10 {strides = array<i32>} : memref<400x384xbf16, #tpu.memory_space<vmem>>, vector<16x384xbf16>,
    %12 = vector.extract_strided_slice %3 {offsets = [0, 4], sizes = [16, 384], strides = [1, 1]} : vector<16x512xbf16> to vector<16x384xbf16>
    %c64 = arith.constant 64 : index
    %c0_8 = arith.constant 0 : index
    %13 = vector.load %arg8[%c64, %c0_8] : memref<400x384xbf16, #tpu.memory_space<vmem>>, vector<16x384xbf16>
    tpu.vector_store %arg8[%c64, %c0_8], %12 {strides = array<i32>} : memref<400x384xbf16, #tpu.memory_space<vmem>>, vector<16x384xbf16>,
    %14 = vector.extract_strided_slice %3 {offsets = [0, 20], sizes = [16, 384], strides = [1, 1]} : vector<16x512xbf16> to vector<16x384xbf16>
    %c80 = arith.constant 80 : index
    %c0_9 = arith.constant 0 : index
    %15 = vector.load %arg8[%c80, %c0_9] : memref<400x384xbf16, #tpu.memory_space<vmem>>, vector<16x384xbf16>
    tpu.vector_store %arg8[%c80, %c0_9], %14 {strides = array<i32>} : memref<400x384xbf16, #tpu.memory_space<vmem>>, vector<16x384xbf16>,
    %16 = vector.extract_strided_slice %3 {offsets = [0, 21], sizes = [16, 384], strides = [1, 1]} : vector<16x512xbf16> to vector<16x384xbf16>
    %c96 = arith.constant 96 : index
    %c0_10 = arith.constant 0 : index
    %17 = vector.load %arg8[%c96, %c0_10] : memref<400x384xbf16, #tpu.memory_space<vmem>>, vector<16x384xbf16>
    tpu.vector_store %arg8[%c96, %c0_10], %16 {strides = array<i32>} : memref<400x384xbf16, #tpu.memory_space<vmem>>, vector<16x384xbf16>,
    %18 = vector.extract_strided_slice %3 {offsets = [0, 22], sizes = [16, 384], strides = [1, 1]} : vector<16x512xbf16> to vector<16x384xbf16>
    %c112 = arith.constant 112 : index
    %c0_11 = arith.constant 0 : index
    %19 = vector.load %arg8[%c112, %c0_11] : memref<400x384xbf16, #tpu.memory_space<vmem>>, vector<16x384xbf16>
    tpu.vector_store %arg8[%c112, %c0_11], %18 {strides = array<i32>} : memref<400x384xbf16, #tpu.memory_space<vmem>>, vector<16x384xbf16>,
    %20 = vector.extract_strided_slice %3 {offsets = [0, 23], sizes = [16, 384], strides = [1, 1]} : vector<16x512xbf16> to vector<16x384xbf16>
    %c128 = arith.constant 128 : index
    %c0_12 = arith.constant 0 : index
    %21 = vector.load %arg8[%c128, %c0_12] : memref<400x384xbf16, #tpu.memory_space<vmem>>, vector<16x384xbf16>
    tpu.vector_store %arg8[%c128, %c0_12], %20 {strides = array<i32>} : memref<400x384xbf16, #tpu.memory_space<vmem>>, vector<16x384xbf16>,
    %22 = vector.extract_strided_slice %3 {offsets = [0, 24], sizes = [16, 384], strides = [1, 1]} : vector<16x512xbf16> to vector<16x384xbf16>
    %c144 = arith.constant 144 : index
    %c0_13 = arith.constant 0 : index
    %23 = vector.load %arg8[%c144, %c0_13] : memref<400x384xbf16, #tpu.memory_space<vmem>>, vector<16x384xbf16>
    tpu.vector_store %arg8[%c144, %c0_13], %22 {strides = array<i32>} : memref<400x384xbf16, #tpu.memory_space<vmem>>, vector<16x384xbf16>,
    %24 = vector.extract_strided_slice %3 {offsets = [0, 40], sizes = [16, 384], strides = [1, 1]} : vector<16x512xbf16> to vector<16x384xbf16>
    %c160 = arith.constant 160 : index
    %c0_14 = arith.constant 0 : index
    %25 = vector.load %arg8[%c160, %c0_14] : memref<400x384xbf16, #tpu.memory_space<vmem>>, vector<16x384xbf16>
    tpu.vector_store %arg8[%c160, %c0_14], %24 {strides = array<i32>} : memref<400x384xbf16, #tpu.memory_space<vmem>>, vector<16x384xbf16>,
    %26 = vector.extract_strided_slice %3 {offsets = [0, 41], sizes = [16, 384], strides = [1, 1]} : vector<16x512xbf16> to vector<16x384xbf16>
    %c176 = arith.constant 176 : index
    %c0_15 = arith.constant 0 : index
    %27 = vector.load %arg8[%c176, %c0_15] : memref<400x384xbf16, #tpu.memory_space<vmem>>, vector<16x384xbf16>
    tpu.vector_store %arg8[%c176, %c0_15], %26 {strides = array<i32>} : memref<400x384xbf16, #tpu.memory_space<vmem>>, vector<16x384xbf16>,
    %28 = vector.extract_strided_slice %3 {offsets = [0, 42], sizes = [16, 384], strides = [1, 1]} : vector<16x512xbf16> to vector<16x384xbf16>
    %c192 = arith.constant 192 : index
    %c0_16 = arith.constant 0 : index
    %29 = vector.load %arg8[%c192, %c0_16] : memref<400x384xbf16, #tpu.memory_space<vmem>>, vector<16x384xbf16>
    tpu.vector_store %arg8[%c192, %c0_16], %28 {strides = array<i32>} : memref<400x384xbf16, #tpu.memory_space<vmem>>, vector<16x384xbf16>,
    %30 = vector.extract_strided_slice %3 {offsets = [0, 43], sizes = [16, 384], strides = [1, 1]} : vector<16x512xbf16> to vector<16x384xbf16>
    %c208 = arith.constant 208 : index
    %c0_17 = arith.constant 0 : index
    %31 = vector.load %arg8[%c208, %c0_17] : memref<400x384xbf16, #tpu.memory_space<vmem>>, vector<16x384xbf16>
    tpu.vector_store %arg8[%c208, %c0_17], %30 {strides = array<i32>} : memref<400x384xbf16, #tpu.memory_space<vmem>>, vector<16x384xbf16>,
    %32 = vector.extract_strided_slice %3 {offsets = [0, 44], sizes = [16, 384], strides = [1, 1]} : vector<16x512xbf16> to vector<16x384xbf16>
    %c224 = arith.constant 224 : index
    %c0_18 = arith.constant 0 : index
    %33 = vector.load %arg8[%c224, %c0_18] : memref<400x384xbf16, #tpu.memory_space<vmem>>, vector<16x384xbf16>
    tpu.vector_store %arg8[%c224, %c0_18], %32 {strides = array<i32>} : memref<400x384xbf16, #tpu.memory_space<vmem>>, vector<16x384xbf16>,
    %34 = vector.extract_strided_slice %3 {offsets = [0, 60], sizes = [16, 384], strides = [1, 1]} : vector<16x512xbf16> to vector<16x384xbf16>
    %c240 = arith.constant 240 : index
    %c0_19 = arith.constant 0 : index
    %35 = vector.load %arg8[%c240, %c0_19] : memref<400x384xbf16, #tpu.memory_space<vmem>>, vector<16x384xbf16>
    tpu.vector_store %arg8[%c240, %c0_19], %34 {strides = array<i32>} : memref<400x384xbf16, #tpu.memory_space<vmem>>, vector<16x384xbf16>,
    %36 = vector.extract_strided_slice %3 {offsets = [0, 61], sizes = [16, 384], strides = [1, 1]} : vector<16x512xbf16> to vector<16x384xbf16>
    %c256 = arith.constant 256 : index
    %c0_20 = arith.constant 0 : index
    %37 = vector.load %arg8[%c256, %c0_20] : memref<400x384xbf16, #tpu.memory_space<vmem>>, vector<16x384xbf16>
    tpu.vector_store %arg8[%c256, %c0_20], %36 {strides = array<i32>} : memref<400x384xbf16, #tpu.memory_space<vmem>>, vector<16x384xbf16>,
    %38 = vector.extract_strided_slice %3 {offsets = [0, 62], sizes = [16, 384], strides = [1, 1]} : vector<16x512xbf16> to vector<16x384xbf16>
    %c272 = arith.constant 272 : index
    %c0_21 = arith.constant 0 : index
    %39 = vector.load %arg8[%c272, %c0_21] : memref<400x384xbf16, #tpu.memory_space<vmem>>, vector<16x384xbf16>
    tpu.vector_store %arg8[%c272, %c0_21], %38 {strides = array<i32>} : memref<400x384xbf16, #tpu.memory_space<vmem>>, vector<16x384xbf16>,
    %40 = vector.extract_strided_slice %3 {offsets = [0, 63], sizes = [16, 384], strides = [1, 1]} : vector<16x512xbf16> to vector<16x384xbf16>
    %c288 = arith.constant 288 : index
    %c0_22 = arith.constant 0 : index
    %41 = vector.load %arg8[%c288, %c0_22] : memref<400x384xbf16, #tpu.memory_space<vmem>>, vector<16x384xbf16>
    tpu.vector_store %arg8[%c288, %c0_22], %40 {strides = array<i32>} : memref<400x384xbf16, #tpu.memory_space<vmem>>, vector<16x384xbf16>,
    %42 = vector.extract_strided_slice %3 {offsets = [0, 64], sizes = [16, 384], strides = [1, 1]} : vector<16x512xbf16> to vector<16x384xbf16>
    %c304 = arith.constant 304 : index
    %c0_23 = arith.constant 0 : index
    %43 = vector.load %arg8[%c304, %c0_23] : memref<400x384xbf16, #tpu.memory_space<vmem>>, vector<16x384xbf16>
    tpu.vector_store %arg8[%c304, %c0_23], %42 {strides = array<i32>} : memref<400x384xbf16, #tpu.memory_space<vmem>>, vector<16x384xbf16>,
    %44 = vector.extract_strided_slice %3 {offsets = [0, 80], sizes = [16, 384], strides = [1, 1]} : vector<16x512xbf16> to vector<16x384xbf16>
    %c320 = arith.constant 320 : index
    %c0_24 = arith.constant 0 : index
    %45 = vector.load %arg8[%c320, %c0_24] : memref<400x384xbf16, #tpu.memory_space<vmem>>, vector<16x384xbf16>
    tpu.vector_store %arg8[%c320, %c0_24], %44 {strides = array<i32>} : memref<400x384xbf16, #tpu.memory_space<vmem>>, vector<16x384xbf16>,
    %46 = vector.extract_strided_slice %3 {offsets = [0, 81], sizes = [16, 384], strides = [1, 1]} : vector<16x512xbf16> to vector<16x384xbf16>
    %c336 = arith.constant 336 : index
    %c0_25 = arith.constant 0 : index
    %47 = vector.load %arg8[%c336, %c0_25] : memref<400x384xbf16, #tpu.memory_space<vmem>>, vector<16x384xbf16>
    tpu.vector_store %arg8[%c336, %c0_25], %46 {strides = array<i32>} : memref<400x384xbf16, #tpu.memory_space<vmem>>, vector<16x384xbf16>,
    %48 = vector.extract_strided_slice %3 {offsets = [0, 82], sizes = [16, 384], strides = [1, 1]} : vector<16x512xbf16> to vector<16x384xbf16>
    %c352 = arith.constant 352 : index
    %c0_26 = arith.constant 0 : index
    %49 = vector.load %arg8[%c352, %c0_26] : memref<400x384xbf16, #tpu.memory_space<vmem>>, vector<16x384xbf16>
    tpu.vector_store %arg8[%c352, %c0_26], %48 {strides = array<i32>} : memref<400x384xbf16, #tpu.memory_space<vmem>>, vector<16x384xbf16>,
    %50 = vector.extract_strided_slice %3 {offsets = [0, 83], sizes = [16, 384], strides = [1, 1]} : vector<16x512xbf16> to vector<16x384xbf16>
    %c368 = arith.constant 368 : index
    %c0_27 = arith.constant 0 : index
    %51 = vector.load %arg8[%c368, %c0_27] : memref<400x384xbf16, #tpu.memory_space<vmem>>, vector<16x384xbf16>
    tpu.vector_store %arg8[%c368, %c0_27], %50 {strides = array<i32>} : memref<400x384xbf16, #tpu.memory_space<vmem>>, vector<16x384xbf16>,
    %52 = vector.extract_strided_slice %3 {offsets = [0, 84], sizes = [16, 384], strides = [1, 1]} : vector<16x512xbf16> to vector<16x384xbf16>
    %c384 = arith.constant 384 : index
    %c0_28 = arith.constant 0 : index
    %53 = vector.load %arg8[%c384, %c0_28] : memref<400x384xbf16, #tpu.memory_space<vmem>>, vector<16x384xbf16>
    tpu.vector_store %arg8[%c384, %c0_28], %52 {strides = array<i32>} : memref<400x384xbf16, #tpu.memory_space<vmem>>, vector<16x384xbf16>,
    %c0_29 = arith.constant 0 : index
    %c0_30 = arith.constant 0 : index
    %54 = vector.load %arg3[%c0_29, %c0_30] : memref<32x400xbf16, #tpu.memory_space<vmem>>, vector<32x400xbf16>
    %c0_31 = arith.constant 0 : index
    %c0_32 = arith.constant 0 : index
    %55 = vector.load %arg8[%c0_31, %c0_32] : memref<400x384xbf16, #tpu.memory_space<vmem>>, vector<400x384xbf16>
    %cst = arith.constant dense<0.000000e+00> : vector<32x384xf32>
    %56 = tpu.matmul %54, %55, %cst {dimension_numbers = #tpu.dot_dimension_numbers<[1], [0], [0], [1], [0, 0, 1, 1], [], []>} : vector<32x400xbf16>, vector<400x384xbf16>, vector<32x384xf32> -> vector<32x384xf32>
    %57 = vector.broadcast %0 : f32 to vector<32x384xf32>
    %58 = arith.cmpf ogt, %56, %57 : vector<32x384xf32>
    %59 = arith.extui %58 : vector<32x384xi1> to vector<32x384xi32>
    %60 = arith.sitofp %59 : vector<32x384xi32> to vector<32x384xf32>
    %61 = arith.truncf %60 : vector<32x384xf32> to vector<32x384xbf16>
    %c0_33 = arith.constant 0 : index
    %c0_34 = arith.constant 0 : index
    %62 = vector.load %arg5[%c0_33, %c0_34] : memref<384x256xbf16, #tpu.memory_space<vmem>>, vector<384x256xbf16>
    %cst_35 = arith.constant dense<0.000000e+00> : vector<32x256xf32>
    %63 = tpu.matmul %61, %62, %cst_35 {dimension_numbers = #tpu.dot_dimension_numbers<[1], [0], [0], [1], [0, 0, 1, 1], [], []>} : vector<32x384xbf16>, vector<384x256xbf16>, vector<32x256xf32> -> vector<32x256xf32>
    %cst_36 = arith.constant 5.000000e-01 : f32
    %64 = vector.broadcast %cst_36 : f32 to vector<32x256xf32>
    %65 = arith.cmpf ogt, %63, %64 : vector<32x256xf32>
    %66 = arith.extui %65 : vector<32x256xi1> to vector<32x256xi32>
    %67 = arith.sitofp %66 : vector<32x256xi32> to vector<32x256xf32>
    %68 = arith.truncf %67 : vector<32x256xf32> to vector<32x256xbf16>
    %69 = vector.extract_strided_slice %68 {offsets = [0, 0], sizes = [32, 128], strides = [1, 1]} : vector<32x256xbf16> to vector<32x128xbf16>
    %c0_37 = arith.constant 0 : index
    %c0_38 = arith.constant 0 : index
    %70 = vector.load %arg9[%c0_37, %c0_38] : memref<128x128xbf16, #tpu.memory_space<vmem>>, vector<32x128xbf16>
    tpu.vector_store %arg9[%c0_37, %c0_38], %69 {strides = array<i32>} : memref<128x128xbf16, #tpu.memory_space<vmem>>, vector<32x128xbf16>,
    %71 = vector.extract_strided_slice %68 {offsets = [0, 1], sizes = [32, 128], strides = [1, 1]} : vector<32x256xbf16> to vector<32x128xbf16>
    %c32_39 = arith.constant 32 : index
    %c0_40 = arith.constant 0 : index
    %72 = vector.load %arg9[%c32_39, %c0_40] : memref<128x128xbf16, #tpu.memory_space<vmem>>, vector<32x128xbf16>
    tpu.vector_store %arg9[%c32_39, %c0_40], %71 {strides = array<i32>} : memref<128x128xbf16, #tpu.memory_space<vmem>>, vector<32x128xbf16>,
    %73 = vector.extract_strided_slice %68 {offsets = [0, 11], sizes = [32, 128], strides = [1, 1]} : vector<32x256xbf16> to vector<32x128xbf16>
    %c64_41 = arith.constant 64 : index
    %c0_42 = arith.constant 0 : index
    %74 = vector.load %arg9[%c64_41, %c0_42] : memref<128x128xbf16, #tpu.memory_space<vmem>>, vector<32x128xbf16>
    tpu.vector_store %arg9[%c64_41, %c0_42], %73 {strides = array<i32>} : memref<128x128xbf16, #tpu.memory_space<vmem>>, vector<32x128xbf16>,
    %75 = vector.extract_strided_slice %68 {offsets = [0, 12], sizes = [32, 128], strides = [1, 1]} : vector<32x256xbf16> to vector<32x128xbf16>
    %c96_43 = arith.constant 96 : index
    %c0_44 = arith.constant 0 : index
    %76 = vector.load %arg9[%c96_43, %c0_44] : memref<128x128xbf16, #tpu.memory_space<vmem>>, vector<32x128xbf16>
    tpu.vector_store %arg9[%c96_43, %c0_44], %75 {strides = array<i32>} : memref<128x128xbf16, #tpu.memory_space<vmem>>, vector<32x128xbf16>,
    %c0_45 = arith.constant 0 : index
    %c0_46 = arith.constant 0 : index
    %77 = vector.load %arg4[%c0_45, %c0_46] : memref<150x128xbf16, #tpu.memory_space<vmem>>, vector<150x128xbf16>
    %c0_47 = arith.constant 0 : index
    %c0_48 = arith.constant 0 : index
    %78 = vector.load %arg9[%c0_47, %c0_48] : memref<128x128xbf16, #tpu.memory_space<vmem>>, vector<128x128xbf16>
    %cst_49 = arith.constant dense<0.000000e+00> : vector<150x128xf32>
    %79 = tpu.matmul %77, %78, %cst_49 {dimension_numbers = #tpu.dot_dimension_numbers<[1], [0], [0], [1], [0, 0, 1, 1], [], []>} : vector<150x128xbf16>, vector<128x128xbf16>, vector<150x128xf32> -> vector<150x128xf32>
    %80 = vector.broadcast %1 : f32 to vector<150x128xf32>
    %81 = arith.cmpf ogt, %79, %80 : vector<150x128xf32>
    %82 = arith.extui %81 : vector<150x128xi1> to vector<150x128xi32>
    %83 = arith.sitofp %82 : vector<150x128xi32> to vector<150x128xf32>
    %84 = arith.truncf %83 : vector<150x128xf32> to vector<150x128xbf16>
    %c0_50 = arith.constant 0 : index
    %c0_51 = arith.constant 0 : index
    %85 = vector.load %arg6[%c0_50, %c0_51] : memref<128x128xbf16, #tpu.memory_space<vmem>>, vector<128x128xbf16>
    %cst_52 = arith.constant dense<0.000000e+00> : vector<150x128xf32>
    %86 = tpu.matmul %84, %85, %cst_52 {dimension_numbers = #tpu.dot_dimension_numbers<[1], [0], [0], [1], [0, 0, 1, 1], [], []>} : vector<150x128xbf16>, vector<128x128xbf16>, vector<150x128xf32> -> vector<150x128xf32>
    %cst_53 = arith.constant 5.000000e-01 : f32
    %87 = vector.broadcast %cst_53 : f32 to vector<150x128xf32>
    %88 = arith.cmpf ogt, %86, %87 : vector<150x128xf32>
    %89 = arith.extui %88 : vector<150x128xi1> to vector<150x128xi32>
    %90 = arith.sitofp %89 : vector<150x128xi32> to vector<150x128xf32>
    %c0_54 = arith.constant 0 : index
    %c0_55 = arith.constant 0 : index
    %c0_56 = arith.constant 0 : index
    %91 = vector.load %arg7[%c0_54, %c0_55, %c0_56] : memref<1x150x128xf32, #tpu.memory_space<vmem>>, vector<1x150x128xf32>
    %92 = vector.shape_cast %91 : vector<1x150x128xf32> to vector<150x128xf32>
    %93 = vector.shape_cast %90 : vector<150x128xf32> to vector<1x150x128xf32>
    tpu.vector_store %arg7[%c0_54, %c0_55, %c0_56], %93 {strides = array<i32>} : memref<1x150x128xf32, #tpu.memory_space<vmem>>, vector<1x150x128xf32>,
    return
  }
  func.func @transform_0(%arg0: i32) -> i32 {
    %c0_i32 = arith.constant 0 : i32
    %c0_i32_0 = arith.constant 0 : i32
    return %c0_i32 : i32
  }
  func.func @transform_1(%arg0: i32) -> (i32, i32, i32) {
    %c0_i32 = arith.constant 0 : i32
    %c0_i32_0 = arith.constant 0 : i32
    %c0_i32_1 = arith.constant 0 : i32
    return %arg0, %c0_i32, %c0_i32_0 : i32, i32, i32
  }
  func.func @transform_2(%arg0: i32) -> (i32, i32) {
    %c0_i32 = arith.constant 0 : i32
    %c0_i32_0 = arith.constant 0 : i32
    %c0_i32_1 = arith.constant 0 : i32
    return %c0_i32, %c0_i32_0 : i32, i32
  }
  func.func @transform_3(%arg0: i32) -> (i32, i32) {
    %c0_i32 = arith.constant 0 : i32
    %c0_i32_0 = arith.constant 0 : i32
    %c0_i32_1 = arith.constant 0 : i32
    return %c0_i32, %c0_i32_0 : i32, i32
  }
  func.func @transform_4(%arg0: i32) -> (i32, i32) {
    %c0_i32 = arith.constant 0 : i32
    %c0_i32_0 = arith.constant 0 : i32
    %c0_i32_1 = arith.constant 0 : i32
    return %c0_i32, %c0_i32_0 : i32, i32
  }
  func.func @transform_5(%arg0: i32) -> (i32, i32) {
    %c0_i32 = arith.constant 0 : i32
    %c0_i32_0 = arith.constant 0 : i32
    %c0_i32_1 = arith.constant 0 : i32
    return %c0_i32, %c0_i32_0 : i32, i32
  }
  func.func @transform_6(%arg0: i32) -> (i32, i32, i32) {
    %c0_i32 = arith.constant 0 : i32
    %c0_i32_0 = arith.constant 0 : i32
    %c0_i32_1 = arith.constant 0 : i32
    return %arg0, %c0_i32, %c0_i32_0 : i32, i32, i32
  }
}

</mosaic_0001>

<llo_original>
// kernel: kheradpisheh_forward.1
$region0: #{kheradpisheh_forward.1}
  #allocation0 [shape = 'u32[]', space=smem, size = 0x4, offset = 0x4, fixed_abs, tag = 'smem constant byte address 0x4 - core index']
  #allocation1 [shape = 'u32[72,128]{1,0:T(1,128)}', space=vmem, size = 0x9000, scoped, tag = 'internal scratch']
  #allocation2 [shape = 'bf16[400,384]{1,0:T(8,128)(2,1)}', space=vmem, size = 0x4b000, scoped, tag = 'scratch operand']
  #allocation3 [shape = 'bf16[128,128]{1,0:T(8,128)(2,1)}', space=vmem, size = 0x8000, scoped, tag = 'scratch operand']
  %s0 = inlined_call_operand.vmem [shape: f32[2], index: 0, kind: input, shape index: {}]
  %s1 = inlined_call_operand.vmem [shape: bf16[2,16,512], index: 1, kind: input, shape index: {}]
  %s2 = inlined_call_operand.vmem [shape: bf16[32,400], index: 2, kind: input, shape index: {}]
  %s3 = inlined_call_operand.vmem [shape: bf16[150,128], index: 3, kind: input, shape index: {}]
  %s4 = inlined_call_operand.vmem [shape: bf16[384,256], index: 4, kind: input, shape index: {}]
  %s5 = inlined_call_operand.vmem [shape: bf16[128,128], index: 5, kind: input, shape index: {}]
  %s6 = inlined_call_operand.vmem [shape: f32[2,150,128], index: 6, kind: output, shape index: {}]
  %s7 = sld [smem:[#allocation0]]
  $region61: #{kheradpisheh_forward.1} parent=0
    _
  %s9 = ssub.s32 1, %s7
  %s10 = scalar_select 0, %s9, %s7
  $region1: #{kheradpisheh_forward.1} parent=0
    #allocation4 [shape = 'u8[512]{0}', space=smem, size = 0x200, scoped, tag = 'input window, operand 0, single buffered']
    #allocation5 [shape = 's32[2]{0}', space=sflag, size = 0x8, scoped, tag = 'scoped memory for kheradpisheh_forward.1']
    %11 = vsyncpa [#allocation5], 0
    loop: start=0, step=1, limit=4
    $region2: #{kheradpisheh_forward.1} parent=1 // loop_pre_header
      _
    $region3: #{kheradpisheh_forward.1} parent=1 // loop_header
      %s13 = sphi 0, %s17
      %p14 = scmp.ge.s32.totalorder %s13, 4
      %s21 = sphi 0, %s21
      %s23 = sphi 0, %s21
      %s24 = sphi 0, %s23
      %s38 = sphi 0, %s24
      %s44 = sphi 0, %s46
      %s47 = sphi 0, %s44
      %s48 = sphi 0, %s47
      %s64 = sphi 0, %s48
      %s68 = sphi 0, %s68
      %s70 = sphi 0, %s68
      %s71 = sphi 0, %s70
      %s85 = sphi 0, %s71
      %s89 = sphi 0, %s89
      %s91 = sphi 0, %s89
      %s92 = sphi 0, %s91
      %s106 = sphi 0, %s92
      %s110 = sphi 0, %s110
      %s112 = sphi 0, %s110
      %s113 = sphi 0, %s112
      %s127 = sphi 0, %s113
      %s131 = sphi 0, %s131
      %s133 = sphi 0, %s131
      %s134 = sphi 0, %s133
      %s148 = sphi 0, %s134
      %s154 = sphi 0, %s156
      %s157 = sphi 0, %s154
      %s158 = sphi 0, %s157
      %s174 = sphi 0, %s158
    $region4: #{kheradpisheh_forward.1} parent=1 // loop_header_branch
      %16 = sbr.rel (%p14) target = $region8
    $region5: #{kheradpisheh_forward.1} parent=1 // loop_body
      %s18 = ssub.s32 %s13, 1
      %s19 = ssub.s32 %s13, 2
      %s20 = sadd.s32 %s13, 1
      %s22 = sadd.s32 %s21, 1
      %p25 = scmp.eq.s32.totalorder %s13, 1
      %p26 = scmp.ne.s32.totalorder %s21, %s23
      %p27 = scmp.eq.s32.totalorder %s13, 0
      %p28 = por %p26, %p27
      %p29 = scmp.ne.s32.totalorder %s21, %s23
      %p30 = scmp.eq.s32.totalorder %s18, 1
      %p31 = por %p29, %p30
      %p32 = scmp.ne.s32.totalorder %s23, %s24
      %p33 = scmp.eq.s32.totalorder %s18, 0
      %p34 = por %p32, %p33
      %p35 = scmp.ne.s32.totalorder %s23, %s24
      %p36 = scmp.eq.s32.totalorder %s19, 1
      %p37 = por %p35, %p36
      %p39 = scmp.ne.s32.totalorder %s24, %s38
      %p40 = scmp.eq.s32.totalorder %s19, 0
      %p41 = por %p39, %p40
      %s42 = ssub.s32 %s13, %s20
      %p43 = scmp.eq.s32.totalorder %s42, 0
      %s45 = sadd.s32 %s44, 1
      %s46 = scalar_select %p43, %s44, %s45
      %p49 = pneg %p43
      %p50 = scmp.eq.s32.totalorder %s13, 1
      %p51 = por %p49, %p50
      %p52 = scmp.ne.s32.totalorder %s44, %s47
      %p53 = scmp.eq.s32.totalorder %s13, 0
      %p54 = por %p52, %p53
      %p55 = scmp.ne.s32.totalorder %s44, %s47
      %p56 = scmp.eq.s32.totalorder %s18, 1
      %p57 = por %p55, %p56
      %p58 = scmp.ne.s32.totalorder %s47, %s48
      %p59 = scmp.eq.s32.totalorder %s18, 0
      %p60 = por %p58, %p59
      %p61 = scmp.ne.s32.totalorder %s47, %s48
      %p62 = scmp.eq.s32.totalorder %s19, 1
      %p63 = por %p61, %p62
      %p65 = scmp.ne.s32.totalorder %s48, %s64
      %p66 = scmp.eq.s32.totalorder %s19, 0
      %p67 = por %p65, %p66
      %s69 = sadd.s32 %s68, 1
      %p72 = scmp.eq.s32.totalorder %s13, 1
      %p73 = scmp.ne.s32.totalorder %s68, %s70
      %p74 = scmp.eq.s32.totalorder %s13, 0
      %p75 = por %p73, %p74
      %p76 = scmp.ne.s32.totalorder %s68, %s70
      %p77 = scmp.eq.s32.totalorder %s18, 1
      %p78 = por %p76, %p77
      %p79 = scmp.ne.s32.totalorder %s70, %s71
      %p80 = scmp.eq.s32.totalorder %s18, 0
      %p81 = por %p79, %p80
      %p82 = scmp.ne.s32.totalorder %s70, %s71
      %p83 = scmp.eq.s32.totalorder %s19, 1
      %p84 = por %p82, %p83
      %p86 = scmp.ne.s32.totalorder %s71, %s85
      %p87 = scmp.eq.s32.totalorder %s19, 0
      %p88 = por %p86, %p87
      %s90 = sadd.s32 %s89, 1
      %p93 = scmp.eq.s32.totalorder %s13, 1
      %p94 = scmp.ne.s32.totalorder %s89, %s91
      %p95 = scmp.eq.s32.totalorder %s13, 0
      %p96 = por %p94, %p95
      %p97 = scmp.ne.s32.totalorder %s89, %s91
      %p98 = scmp.eq.s32.totalorder %s18, 1
      %p99 = por %p97, %p98
      %p100 = scmp.ne.s32.totalorder %s91, %s92
      %p101 = scmp.eq.s32.totalorder %s18, 0
      %p102 = por %p100, %p101
      %p103 = scmp.ne.s32.totalorder %s91, %s92
      %p104 = scmp.eq.s32.totalorder %s19, 1
      %p105 = por %p103, %p104
      %p107 = scmp.ne.s32.totalorder %s92, %s106
      %p108 = scmp.eq.s32.totalorder %s19, 0
      %p109 = por %p107, %p108
      %s111 = sadd.s32 %s110, 1
      %p114 = scmp.eq.s32.totalorder %s13, 1
      %p115 = scmp.ne.s32.totalorder %s110, %s112
      %p116 = scmp.eq.s32.totalorder %s13, 0
      %p117 = por %p115, %p116
      %p118 = scmp.ne.s32.totalorder %s110, %s112
      %p119 = scmp.eq.s32.totalorder %s18, 1
      %p120 = por %p118, %p119
      %p121 = scmp.ne.s32.totalorder %s112, %s113
      %p122 = scmp.eq.s32.totalorder %s18, 0
      %p123 = por %p121, %p122
      %p124 = scmp.ne.s32.totalorder %s112, %s113
      %p125 = scmp.eq.s32.totalorder %s19, 1
      %p126 = por %p124, %p125
      %p128 = scmp.ne.s32.totalorder %s113, %s127
      %p129 = scmp.eq.s32.totalorder %s19, 0
      %p130 = por %p128, %p129
      %s132 = sadd.s32 %s131, 1
      %p135 = scmp.eq.s32.totalorder %s13, 1
      %p136 = scmp.ne.s32.totalorder %s131, %s133
      %p137 = scmp.eq.s32.totalorder %s13, 0
      %p138 = por %p136, %p137
      %p139 = scmp.ne.s32.totalorder %s131, %s133
      %p140 = scmp.eq.s32.totalorder %s18, 1
      %p141 = por %p139, %p140
      %p142 = scmp.ne.s32.totalorder %s133, %s134
      %p143 = scmp.eq.s32.totalorder %s18, 0
      %p144 = por %p142, %p143
      %p145 = scmp.ne.s32.totalorder %s133, %s134
      %p146 = scmp.eq.s32.totalorder %s19, 1
      %p147 = por %p145, %p146
      %p149 = scmp.ne.s32.totalorder %s134, %s148
      %p150 = scmp.eq.s32.totalorder %s19, 0
      %p151 = por %p149, %p150
      %s152 = ssub.s32 %s13, %s20
      %p153 = scmp.eq.s32.totalorder %s152, 0
      %s155 = sadd.s32 %s154, 1
      %s156 = scalar_select %p153, %s154, %s155
      %p159 = pneg %p153
      %p160 = scmp.eq.s32.totalorder %s13, 1
      %p161 = por %p159, %p160
      %p162 = scmp.ne.s32.totalorder %s154, %s157
      %p163 = scmp.eq.s32.totalorder %s13, 0
      %p164 = por %p162, %p163
      %p165 = scmp.ne.s32.totalorder %s154, %s157
      %p166 = scmp.eq.s32.totalorder %s18, 1
      %p167 = por %p165, %p166
      %p168 = scmp.ne.s32.totalorder %s157, %s158
      %p169 = scmp.eq.s32.totalorder %s18, 0
      %p170 = por %p168, %p169
      %p171 = scmp.ne.s32.totalorder %s157, %s158
      %p172 = scmp.eq.s32.totalorder %s19, 1
      %p173 = por %p171, %p172
      %p175 = scmp.ne.s32.totalorder %s158, %s174
      %p176 = scmp.eq.s32.totalorder %s19, 0
      %p177 = por %p175, %p176
      %p178 = scmp.le.s32.totalorder 1, %s13
      %p179 = scmp.lt.s32.totalorder %s13, 3
      %p180 = pnand %p178, %p179
      %p181 = pneg %p180
      // Predicated region
      $region9: #{kheradpisheh_forward.1} parent=5 // pred_check
        _
      $region10: #{kheradpisheh_forward.1} parent=5 // pred_check_branch
        %183 = sbr.rel (%p180) target = $region12
      $region11: #{kheradpisheh_forward.1} parent=5 // pred_region
        %s184 = ssub.s32 %s13, 1
        // Predicated region
        $region13: #{kheradpisheh_forward.1} parent=11 // pred_check
          %p185 = pneg %p34
        $region14: #{kheradpisheh_forward.1} parent=11 // pred_check_branch
          %187 = sbr.rel (%p185) target = $region16
        $region15: #{kheradpisheh_forward.1} parent=11 // pred_region
          %189 = vsyncadd [#allocation5], 0
          %s191 = sshll.u32 %s0, 4
          %s192 = int_to_ptr.vmem [resolvable:$true] %s191
          %194 = dma.vmem_to_smem %s192, 16, [#allocation4], [#allocation5]
        $region16: #{kheradpisheh_forward.1} parent=11 // pred_fallthru
          _
        // Predicated region
        $region17: #{kheradpisheh_forward.1} parent=11 // pred_check
          %p195 = pneg %p81
        $region18: #{kheradpisheh_forward.1} parent=11 // pred_check_branch
          %197 = sbr.rel (%p195) target = $region20
        $region19: #{kheradpisheh_forward.1} parent=11 // pred_region
          _
        $region20: #{kheradpisheh_forward.1} parent=11 // pred_fallthru
          _
        // Predicated region
        $region21: #{kheradpisheh_forward.1} parent=11 // pred_check
          %p198 = pneg %p102
        $region22: #{kheradpisheh_forward.1} parent=11 // pred_check_branch
          %200 = sbr.rel (%p198) target = $region24
        $region23: #{kheradpisheh_forward.1} parent=11 // pred_region
          _
        $region24: #{kheradpisheh_forward.1} parent=11 // pred_fallthru
          _
        // Predicated region
        $region25: #{kheradpisheh_forward.1} parent=11 // pred_check
          %p201 = pneg %p123
        $region26: #{kheradpisheh_forward.1} parent=11 // pred_check_branch
          %203 = sbr.rel (%p201) target = $region28
        $region27: #{kheradpisheh_forward.1} parent=11 // pred_region
          _
        $region28: #{kheradpisheh_forward.1} parent=11 // pred_fallthru
          _
        // Predicated region
        $region29: #{kheradpisheh_forward.1} parent=11 // pred_check
          %p204 = pneg %p144
        $region30: #{kheradpisheh_forward.1} parent=11 // pred_check_branch
          %206 = sbr.rel (%p204) target = $region32
        $region31: #{kheradpisheh_forward.1} parent=11 // pred_region
          _
        $region32: #{kheradpisheh_forward.1} parent=11 // pred_fallthru
          _
      $region12: #{kheradpisheh_forward.1} parent=5 // pred_fallthru
        _
      %p207 = scmp.lt.s32.totalorder %s13, 2
      // Predicated region
      $region33: #{kheradpisheh_forward.1} parent=5 // pred_check
        %p208 = pneg %p207
      $region34: #{kheradpisheh_forward.1} parent=5 // pred_check_branch
        %210 = sbr.rel (%p208) target = $region36
      $region35: #{kheradpisheh_forward.1} parent=5 // pred_region
        // Predicated region
        $region37: #{kheradpisheh_forward.1} parent=35 // pred_check
          %p211 = pneg %p54
        $region38: #{kheradpisheh_forward.1} parent=35 // pred_check_branch
          %213 = sbr.rel (%p211) target = $region40
        $region39: #{kheradpisheh_forward.1} parent=35 // pred_region
          %p214 = scmp.lt.s32.totalorder %s13, 1
          %s215 = scalar_select %p214, %s13, 1
          %s216 = smul.addr %s215, 8
          %s217 = smul.addr %s216, 4
          %s218 = scalar_lea.vmem %s1, %s217
        $region40: #{kheradpisheh_forward.1} parent=35 // pred_fallthru
          _
      $region36: #{kheradpisheh_forward.1} parent=5 // pred_fallthru
        _
      %p219 = scmp.le.s32.totalorder 1, %s13
      %p220 = scmp.lt.s32.totalorder %s13, 3
      %p221 = pnand %p219, %p220
      %p222 = pneg %p221
      // Predicated region
      $region41: #{kheradpisheh_forward.1} parent=5 // pred_check
        _
      $region42: #{kheradpisheh_forward.1} parent=5 // pred_check_branch
        %224 = sbr.rel (%p221) target = $region44
      $region43: #{kheradpisheh_forward.1} parent=5 // pred_region
        %s225 = ssub.s32 %s13, 1
        // Predicated region
        $region45: #{kheradpisheh_forward.1} parent=43 // pred_check
          %p226 = pneg %p34
        $region46: #{kheradpisheh_forward.1} parent=43 // pred_check_branch
          %228 = sbr.rel (%p226) target = $region48
        $region47: #{kheradpisheh_forward.1} parent=43 // pred_region
          %230 = dma.done [#allocation5], 16
        $region48: #{kheradpisheh_forward.1} parent=43 // pred_fallthru
          _
        %231 = sfence
        %p232 = pneg %p34
        %p233 = pneg %p31
        %p234 = scmp.lt.s32.totalorder %s18, 1
        %s235 = scalar_select %p234, %s18, 1
        %s236 = smul.addr %s235, 8
        %s237 = smul.addr %s236, 4
        %s238 = scalar_lea.vmem %s1, %s237
        %p239 = pneg %p60
        %p240 = pneg %p57
        %p241 = pneg %p81
        %p242 = pneg %p78
        %p243 = pneg %p102
        %p244 = pneg %p99
        %p245 = pneg %p123
        %p246 = pneg %p120
        %p247 = pneg %p144
        %p248 = pneg %p141
        %p249 = pneg %p170
        %p250 = pneg %p167
        %p251 = scmp.lt.s32.totalorder %s18, 1
        %s252 = scalar_select %p251, %s18, 1
        %s253 = smul.addr %s252, 19
        %s254 = smul.addr %s253, 8
        %s255 = scalar_lea.vmem %s6, %s254
        %p256 = scmp.lt.s32.totalorder %s18, 1
        %s257 = scalar_select %p256, %s18, 1
        %s258 = smul.addr %s257, 8
        %s259 = smul.addr %s258, 4
        %s260 = scalar_lea.vmem %s1, %s259
        %p261 = scmp.lt.s32.totalorder %s18, 1
        %s262 = scalar_select %p261, %s18, 1
        %s263 = smul.addr %s262, 19
        %s264 = smul.addr %s263, 8
        %s265 = scalar_lea.vmem %s6, %s264
        %s267 = sld [smem:[#allocation4]]
        %s268 = sld [smem:[#allocation4 + $0x1]]
        %v269 = vld [vmem:[%s260] sm:$0xff]
        %v270 = vld [vmem:[%s260 + $0x8] sm:$0xff]
        %v271 = vld [vmem:[%s260 + $0x10] sm:$0xff]
        %v272 = vld [vmem:[%s260 + $0x18] sm:$0xff]
        %273 = vst [vmem:[#allocation2] sm:$0xff] %v269
        %274 = vst [vmem:[#allocation2 + $0x8] sm:$0xf] %v270
        %275 = vst [vmem:[#allocation2 + $0xc] sm:$0xff] %v271
        %276 = vst [vmem:[#allocation2 + $0x14] sm:$0xf] %v272
        %281 = vrot.lane.b32.xlu0 %v269, 127
        %v282 = vpop.permute.xlu0 %281
        %283 = vrot.lane.b32.xlu0 %v270, 127
        %v284 = vpop.permute.xlu0 %283
        %285 = vrot.lane.b32.xlu0 %v271, 127
        %v286 = vpop.permute.xlu0 %285
        %287 = vrot.lane.b32.xlu0 %v272, 127
        %v288 = vpop.permute.xlu0 %287
        %v289 = vrot.slane %v282, 4
        %v290 = vrot.slane %v284, 4
        %v291 = vrot.slane %v286, 4
        %v292 = vrot.slane %v288, 4
        %vm293 = vcmask 1043456
        %v294 = vsel %vm293, %v289, %v290
        %vm295 = vcmask 1039360
        %v296 = vsel %vm295, %v282, %v294
        %v297 = vsel %vm295, %v284, %v290
        %v298 = vsel %vm293, %v291, %v292
        %v299 = vsel %vm295, %v286, %v298
        %v300 = vsel %vm295, %v288, %v292
        %305 = vst [vmem:[#allocation2 + $0x18] sm:$0xff] %v296
        %306 = vst [vmem:[#allocation2 + $0x20] sm:$0xf] %v297
        %307 = vst [vmem:[#allocation2 + $0x24] sm:$0xff] %v299
        %308 = vst [vmem:[#allocation2 + $0x2c] sm:$0xf] %v300
        %309 = vrot.lane.b32.xlu0 %v269, 126
        %v310 = vpop.permute.xlu0 %309
        %311 = vrot.lane.b32.xlu0 %v270, 126
        %v312 = vpop.permute.xlu0 %311
        %313 = vrot.lane.b32.xlu0 %v271, 126
        %v314 = vpop.permute.xlu0 %313
        %315 = vrot.lane.b32.xlu0 %v272, 126
        %v316 = vpop.permute.xlu0 %315
        %v317 = vrot.slane %v310, 4
        %v318 = vrot.slane %v312, 4
        %v319 = vrot.slane %v314, 4
        %v320 = vrot.slane %v316, 4
        %v321 = vsel %vm293, %v317, %v318
        %vm322 = vcmask 1031168
        %v323 = vsel %vm322, %v310, %v321
        %v324 = vsel %vm322, %v312, %v318
        %v325 = vsel %vm293, %v319, %v320
        %v326 = vsel %vm322, %v314, %v325
        %v327 = vsel %vm322, %v316, %v320
        %332 = vst [vmem:[#allocation2 + $0x30] sm:$0xff] %v323
        %333 = vst [vmem:[#allocation2 + $0x38] sm:$0xf] %v324
        %334 = vst [vmem:[#allocation2 + $0x3c] sm:$0xff] %v326
        %335 = vst [vmem:[#allocation2 + $0x44] sm:$0xf] %v327
        %336 = vrot.lane.b32.xlu0 %v269, 125
        %v337 = vpop.permute.xlu0 %336
        %338 = vrot.lane.b32.xlu0 %v270, 125
        %v339 = vpop.permute.xlu0 %338
        %340 = vrot.lane.b32.xlu0 %v271, 125
        %v341 = vpop.permute.xlu0 %340
        %342 = vrot.lane.b32.xlu0 %v272, 125
        %v343 = vpop.permute.xlu0 %342
        %v344 = vrot.slane %v337, 4
        %v345 = vrot.slane %v339, 4
        %v346 = vrot.slane %v341, 4
        %v347 = vrot.slane %v343, 4
        %v348 = vsel %vm293, %v344, %v345
        %vm349 = vcmask 1022976
        %v350 = vsel %vm349, %v337, %v348
        %v351 = vsel %vm349, %v339, %v345
        %v352 = vsel %vm293, %v346, %v347
        %v353 = vsel %vm349, %v341, %v352
        %v354 = vsel %vm349, %v343, %v347
        %359 = vst [vmem:[#allocation2 + $0x48] sm:$0xff] %v350
        %360 = vst [vmem:[#allocation2 + $0x50] sm:$0xf] %v351
        %361 = vst [vmem:[#allocation2 + $0x54] sm:$0xff] %v353
        %362 = vst [vmem:[#allocation2 + $0x5c] sm:$0xf] %v354
        %363 = vrot.lane.b32.xlu0 %v269, 124
        %v364 = vpop.permute.xlu0 %363
        %365 = vrot.lane.b32.xlu0 %v270, 124
        %v366 = vpop.permute.xlu0 %365
        %367 = vrot.lane.b32.xlu0 %v271, 124
        %v368 = vpop.permute.xlu0 %367
        %369 = vrot.lane.b32.xlu0 %v272, 124
        %v370 = vpop.permute.xlu0 %369
        %v371 = vrot.slane %v364, 4
        %v372 = vrot.slane %v366, 4
        %v373 = vrot.slane %v368, 4
        %v374 = vrot.slane %v370, 4
        %v375 = vsel %vm293, %v371, %v372
        %vm376 = vcmask 1014784
        %v377 = vsel %vm376, %v364, %v375
        %v378 = vsel %vm376, %v366, %v372
        %v379 = vsel %vm293, %v373, %v374
        %v380 = vsel %vm376, %v368, %v379
        %v381 = vsel %vm376, %v370, %v374
        %386 = vst [vmem:[#allocation2 + $0x60] sm:$0xff] %v377
        %387 = vst [vmem:[#allocation2 + $0x68] sm:$0xf] %v378
        %388 = vst [vmem:[#allocation2 + $0x6c] sm:$0xff] %v380
        %389 = vst [vmem:[#allocation2 + $0x74] sm:$0xf] %v381
        %390 = vrot.lane.b32.xlu0 %v269, 108
        %v391 = vpop.permute.xlu0 %390
        %392 = vrot.lane.b32.xlu0 %v270, 108
        %v393 = vpop.permute.xlu0 %392
        %394 = vrot.lane.b32.xlu0 %v271, 108
        %v395 = vpop.permute.xlu0 %394
        %396 = vrot.lane.b32.xlu0 %v272, 108
        %v397 = vpop.permute.xlu0 %396
        %v398 = vrot.slane %v391, 4
        %v399 = vrot.slane %v393, 4
        %v400 = vrot.slane %v395, 4
        %v401 = vrot.slane %v397, 4
        %v402 = vsel %vm293, %v398, %v399
        %vm403 = vcmask 883712
        %v404 = vsel %vm403, %v391, %v402
        %v405 = vsel %vm403, %v393, %v399
        %v406 = vsel %vm293, %v400, %v401
        %v407 = vsel %vm403, %v395, %v406
        %v408 = vsel %vm403, %v397, %v401
        %413 = vst [vmem:[#allocation2 + $0x78] sm:$0xff] %v404
        %414 = vst [vmem:[#allocation2 + $0x80] sm:$0xf] %v405
        %415 = vst [vmem:[#allocation2 + $0x84] sm:$0xff] %v407
        %416 = vst [vmem:[#allocation2 + $0x8c] sm:$0xf] %v408
        %417 = vrot.lane.b32.xlu0 %v269, 107
        %v418 = vpop.permute.xlu0 %417
        %419 = vrot.lane.b32.xlu0 %v270, 107
        %v420 = vpop.permute.xlu0 %419
        %421 = vrot.lane.b32.xlu0 %v271, 107
        %v422 = vpop.permute.xlu0 %421
        %423 = vrot.lane.b32.xlu0 %v272, 107
        %v424 = vpop.permute.xlu0 %423
        %v425 = vrot.slane %v418, 4
        %v426 = vrot.slane %v420, 4
        %v427 = vrot.slane %v422, 4
        %v428 = vrot.slane %v424, 4
        %v429 = vsel %vm293, %v425, %v426
        %vm430 = vcmask 875520
        %v431 = vsel %vm430, %v418, %v429
        %v432 = vsel %vm430, %v420, %v426
        %v433 = vsel %vm293, %v427, %v428
        %v434 = vsel %vm430, %v422, %v433
        %v435 = vsel %vm430, %v424, %v428
        %440 = vst [vmem:[#allocation2 + $0x90] sm:$0xff] %v431
        %441 = vst [vmem:[#allocation2 + $0x98] sm:$0xf] %v432
        %442 = vst [vmem:[#allocation2 + $0x9c] sm:$0xff] %v434
        %443 = vst [vmem:[#allocation2 + $0xa4] sm:$0xf] %v435
        %444 = vrot.lane.b32.xlu0 %v269, 106
        %v445 = vpop.permute.xlu0 %444
        %446 = vrot.lane.b32.xlu0 %v270, 106
        %v447 = vpop.permute.xlu0 %446
        %448 = vrot.lane.b32.xlu0 %v271, 106
        %v449 = vpop.permute.xlu0 %448
        %450 = vrot.lane.b32.xlu0 %v272, 106
        %v451 = vpop.permute.xlu0 %450
        %v452 = vrot.slane %v445, 4
        %v453 = vrot.slane %v447, 4
        %v454 = vrot.slane %v449, 4
        %v455 = vrot.slane %v451, 4
        %v456 = vsel %vm293, %v452, %v453
        %vm457 = vcmask 867328
        %v458 = vsel %vm457, %v445, %v456
        %v459 = vsel %vm457, %v447, %v453
        %v460 = vsel %vm293, %v454, %v455
        %v461 = vsel %vm457, %v449, %v460
        %v462 = vsel %vm457, %v451, %v455
        %467 = vst [vmem:[#allocation2 + $0xa8] sm:$0xff] %v458
        %468 = vst [vmem:[#allocation2 + $0xb0] sm:$0xf] %v459
        %469 = vst [vmem:[#allocation2 + $0xb4] sm:$0xff] %v461
        %470 = vst [vmem:[#allocation2 + $0xbc] sm:$0xf] %v462
        %471 = vrot.lane.b32.xlu0 %v269, 105
        %v472 = vpop.permute.xlu0 %471
        %473 = vrot.lane.b32.xlu0 %v270, 105
        %v474 = vpop.permute.xlu0 %473
        %475 = vrot.lane.b32.xlu0 %v271, 105
        %v476 = vpop.permute.xlu0 %475
        %477 = vrot.lane.b32.xlu0 %v272, 105
        %v478 = vpop.permute.xlu0 %477
        %v479 = vrot.slane %v472, 4
        %v480 = vrot.slane %v474, 4
        %v481 = vrot.slane %v476, 4
        %v482 = vrot.slane %v478, 4
        %v483 = vsel %vm293, %v479, %v480
        %vm484 = vcmask 859136
        %v485 = vsel %vm484, %v472, %v483
        %v486 = vsel %vm484, %v474, %v480
        %v487 = vsel %vm293, %v481, %v482
        %v488 = vsel %vm484, %v476, %v487
        %v489 = vsel %vm484, %v478, %v482
        %494 = vst [vmem:[#allocation2 + $0xc0] sm:$0xff] %v485
        %495 = vst [vmem:[#allocation2 + $0xc8] sm:$0xf] %v486
        %496 = vst [vmem:[#allocation2 + $0xcc] sm:$0xff] %v488
        %497 = vst [vmem:[#allocation2 + $0xd4] sm:$0xf] %v489
        %498 = vrot.lane.b32.xlu0 %v269, 104
        %v499 = vpop.permute.xlu0 %498
        %500 = vrot.lane.b32.xlu0 %v270, 104
        %v501 = vpop.permute.xlu0 %500
        %502 = vrot.lane.b32.xlu0 %v271, 104
        %v503 = vpop.permute.xlu0 %502
        %504 = vrot.lane.b32.xlu0 %v272, 104
        %v505 = vpop.permute.xlu0 %504
        %v506 = vrot.slane %v499, 4
        %v507 = vrot.slane %v501, 4
        %v508 = vrot.slane %v503, 4
        %v509 = vrot.slane %v505, 4
        %v510 = vsel %vm293, %v506, %v507
        %vm511 = vcmask 850944
        %v512 = vsel %vm511, %v499, %v510
        %v513 = vsel %vm511, %v501, %v507
        %v514 = vsel %vm293, %v508, %v509
        %v515 = vsel %vm511, %v503, %v514
        %v516 = vsel %vm511, %v505, %v509
        %521 = vst [vmem:[#allocation2 + $0xd8] sm:$0xff] %v512
        %522 = vst [vmem:[#allocation2 + $0xe0] sm:$0xf] %v513
        %523 = vst [vmem:[#allocation2 + $0xe4] sm:$0xff] %v515
        %524 = vst [vmem:[#allocation2 + $0xec] sm:$0xf] %v516
        %525 = vrot.lane.b32.xlu0 %v269, 88
        %v526 = vpop.permute.xlu0 %525
        %527 = vrot.lane.b32.xlu0 %v270, 88
        %v528 = vpop.permute.xlu0 %527
        %529 = vrot.lane.b32.xlu0 %v271, 88
        %v530 = vpop.permute.xlu0 %529
        %531 = vrot.lane.b32.xlu0 %v272, 88
        %v532 = vpop.permute.xlu0 %531
        %v533 = vrot.slane %v526, 4
        %v534 = vrot.slane %v528, 4
        %v535 = vrot.slane %v530, 4
        %v536 = vrot.slane %v532, 4
        %v537 = vsel %vm293, %v533, %v534
        %vm538 = vcmask 719872
        %v539 = vsel %vm538, %v526, %v537
        %v540 = vsel %vm538, %v528, %v534
        %v541 = vsel %vm293, %v535, %v536
        %v542 = vsel %vm538, %v530, %v541
        %v543 = vsel %vm538, %v532, %v536
        %548 = vst [vmem:[#allocation2 + $0xf0] sm:$0xff] %v539
        %549 = vst [vmem:[#allocation2 + $0xf8] sm:$0xf] %v540
        %550 = vst [vmem:[#allocation2 + $0xfc] sm:$0xff] %v542
        %551 = vst [vmem:[#allocation2 + $0x104] sm:$0xf] %v543
        %552 = vrot.lane.b32.xlu0 %v269, 87
        %v553 = vpop.permute.xlu0 %552
        %554 = vrot.lane.b32.xlu0 %v270, 87
        %v555 = vpop.permute.xlu0 %554
        %556 = vrot.lane.b32.xlu0 %v271, 87
        %v557 = vpop.permute.xlu0 %556
        %558 = vrot.lane.b32.xlu0 %v272, 87
        %v559 = vpop.permute.xlu0 %558
        %v560 = vrot.slane %v553, 4
        %v561 = vrot.slane %v555, 4
        %v562 = vrot.slane %v557, 4
        %v563 = vrot.slane %v559, 4
        %v564 = vsel %vm293, %v560, %v561
        %vm565 = vcmask 711680
        %v566 = vsel %vm565, %v553, %v564
        %v567 = vsel %vm565, %v555, %v561
        %v568 = vsel %vm293, %v562, %v563
        %v569 = vsel %vm565, %v557, %v568
        %v570 = vsel %vm565, %v559, %v563
        %575 = vst [vmem:[#allocation2 + $0x108] sm:$0xff] %v566
        %576 = vst [vmem:[#allocation2 + $0x110] sm:$0xf] %v567
        %577 = vst [vmem:[#allocation2 + $0x114] sm:$0xff] %v569
        %578 = vst [vmem:[#allocation2 + $0x11c] sm:$0xf] %v570
        %579 = vrot.lane.b32.xlu0 %v269, 86
        %v580 = vpop.permute.xlu0 %579
        %581 = vrot.lane.b32.xlu0 %v270, 86
        %v582 = vpop.permute.xlu0 %581
        %583 = vrot.lane.b32.xlu0 %v271, 86
        %v584 = vpop.permute.xlu0 %583
        %585 = vrot.lane.b32.xlu0 %v272, 86
        %v586 = vpop.permute.xlu0 %585
        %v587 = vrot.slane %v580, 4
        %v588 = vrot.slane %v582, 4
        %v589 = vrot.slane %v584, 4
        %v590 = vrot.slane %v586, 4
        %v591 = vsel %vm293, %v587, %v588
        %vm592 = vcmask 703488
        %v593 = vsel %vm592, %v580, %v591
        %v594 = vsel %vm592, %v582, %v588
        %v595 = vsel %vm293, %v589, %v590
        %v596 = vsel %vm592, %v584, %v595
        %v597 = vsel %vm592, %v586, %v590
        %602 = vst [vmem:[#allocation2 + $0x120] sm:$0xff] %v593
        %603 = vst [vmem:[#allocation2 + $0x128] sm:$0xf] %v594
        %604 = vst [vmem:[#allocation2 + $0x12c] sm:$0xff] %v596
        %605 = vst [vmem:[#allocation2 + $0x134] sm:$0xf] %v597
        %606 = vrot.lane.b32.xlu0 %v269, 85
        %v607 = vpop.permute.xlu0 %606
        %608 = vrot.lane.b32.xlu0 %v270, 85
        %v609 = vpop.permute.xlu0 %608
        %610 = vrot.lane.b32.xlu0 %v271, 85
        %v611 = vpop.permute.xlu0 %610
        %612 = vrot.lane.b32.xlu0 %v272, 85
        %v613 = vpop.permute.xlu0 %612
        %v614 = vrot.slane %v607, 4
        %v615 = vrot.slane %v609, 4
        %v616 = vrot.slane %v611, 4
        %v617 = vrot.slane %v613, 4
        %v618 = vsel %vm293, %v614, %v615
        %vm619 = vcmask 695296
        %v620 = vsel %vm619, %v607, %v618
        %v621 = vsel %vm619, %v609, %v615
        %v622 = vsel %vm293, %v616, %v617
        %v623 = vsel %vm619, %v611, %v622
        %v624 = vsel %vm619, %v613, %v617
        %629 = vst [vmem:[#allocation2 + $0x138] sm:$0xff] %v620
        %630 = vst [vmem:[#allocation2 + $0x140] sm:$0xf] %v621
        %631 = vst [vmem:[#allocation2 + $0x144] sm:$0xff] %v623
        %632 = vst [vmem:[#allocation2 + $0x14c] sm:$0xf] %v624
        %633 = vrot.lane.b32.xlu0 %v269, 84
        %v634 = vpop.permute.xlu0 %633
        %635 = vrot.lane.b32.xlu0 %v270, 84
        %v636 = vpop.permute.xlu0 %635
        %637 = vrot.lane.b32.xlu0 %v271, 84
        %v638 = vpop.permute.xlu0 %637
        %639 = vrot.lane.b32.xlu0 %v272, 84
        %v640 = vpop.permute.xlu0 %639
        %v641 = vrot.slane %v634, 4
        %v642 = vrot.slane %v636, 4
        %v643 = vrot.slane %v638, 4
        %v644 = vrot.slane %v640, 4
        %v645 = vsel %vm293, %v641, %v642
        %vm646 = vcmask 687104
        %v647 = vsel %vm646, %v634, %v645
        %v648 = vsel %vm646, %v636, %v642
        %v649 = vsel %vm293, %v643, %v644
        %v650 = vsel %vm646, %v638, %v649
        %v651 = vsel %vm646, %v640, %v644
        %656 = vst [vmem:[#allocation2 + $0x150] sm:$0xff] %v647
        %657 = vst [vmem:[#allocation2 + $0x158] sm:$0xf] %v648
        %658 = vst [vmem:[#allocation2 + $0x15c] sm:$0xff] %v650
        %659 = vst [vmem:[#allocation2 + $0x164] sm:$0xf] %v651
        %660 = vrot.lane.b32.xlu0 %v269, 68
        %v661 = vpop.permute.xlu0 %660
        %662 = vrot.lane.b32.xlu0 %v270, 68
        %v663 = vpop.permute.xlu0 %662
        %664 = vrot.lane.b32.xlu0 %v271, 68
        %v665 = vpop.permute.xlu0 %664
        %666 = vrot.lane.b32.xlu0 %v272, 68
        %v667 = vpop.permute.xlu0 %666
        %v668 = vrot.slane %v661, 4
        %v669 = vrot.slane %v663, 4
        %v670 = vrot.slane %v665, 4
        %v671 = vrot.slane %v667, 4
        %v672 = vsel %vm293, %v668, %v669
        %vm673 = vcmask 556032
        %v674 = vsel %vm673, %v661, %v672
        %v675 = vsel %vm673, %v663, %v669
        %v676 = vsel %vm293, %v670, %v671
        %v677 = vsel %vm673, %v665, %v676
        %v678 = vsel %vm673, %v667, %v671
        %683 = vst [vmem:[#allocation2 + $0x168] sm:$0xff] %v674
        %684 = vst [vmem:[#allocation2 + $0x170] sm:$0xf] %v675
        %685 = vst [vmem:[#allocation2 + $0x174] sm:$0xff] %v677
        %686 = vst [vmem:[#allocation2 + $0x17c] sm:$0xf] %v678
        %687 = vrot.lane.b32.xlu0 %v269, 67
        %v688 = vpop.permute.xlu0 %687
        %689 = vrot.lane.b32.xlu0 %v270, 67
        %v690 = vpop.permute.xlu0 %689
        %691 = vrot.lane.b32.xlu0 %v271, 67
        %v692 = vpop.permute.xlu0 %691
        %693 = vrot.lane.b32.xlu0 %v272, 67
        %v694 = vpop.permute.xlu0 %693
        %v695 = vrot.slane %v688, 4
        %v696 = vrot.slane %v690, 4
        %v697 = vrot.slane %v692, 4
        %v698 = vrot.slane %v694, 4
        %v699 = vsel %vm293, %v695, %v696
        %vm700 = vcmask 547840
        %v701 = vsel %vm700, %v688, %v699
        %v702 = vsel %vm700, %v690, %v696
        %v703 = vsel %vm293, %v697, %v698
        %v704 = vsel %vm700, %v692, %v703
        %v705 = vsel %vm700, %v694, %v698
        %710 = vst [vmem:[#allocation2 + $0x180] sm:$0xff] %v701
        %711 = vst [vmem:[#allocation2 + $0x188] sm:$0xf] %v702
        %712 = vst [vmem:[#allocation2 + $0x18c] sm:$0xff] %v704
        %713 = vst [vmem:[#allocation2 + $0x194] sm:$0xf] %v705
        %714 = vrot.lane.b32.xlu0 %v269, 66
        %v715 = vpop.permute.xlu0 %714
        %716 = vrot.lane.b32.xlu0 %v270, 66
        %v717 = vpop.permute.xlu0 %716
        %718 = vrot.lane.b32.xlu0 %v271, 66
        %v719 = vpop.permute.xlu0 %718
        %720 = vrot.lane.b32.xlu0 %v272, 66
        %v721 = vpop.permute.xlu0 %720
        %v722 = vrot.slane %v715, 4
        %v723 = vrot.slane %v717, 4
        %v724 = vrot.slane %v719, 4
        %v725 = vrot.slane %v721, 4
        %v726 = vsel %vm293, %v722, %v723
        %vm727 = vcmask 539648
        %v728 = vsel %vm727, %v715, %v726
        %v729 = vsel %vm727, %v717, %v723
        %v730 = vsel %vm293, %v724, %v725
        %v731 = vsel %vm727, %v719, %v730
        %v732 = vsel %vm727, %v721, %v725
        %737 = vst [vmem:[#allocation2 + $0x198] sm:$0xff] %v728
        %738 = vst [vmem:[#allocation2 + $0x1a0] sm:$0xf] %v729
        %739 = vst [vmem:[#allocation2 + $0x1a4] sm:$0xff] %v731
        %740 = vst [vmem:[#allocation2 + $0x1ac] sm:$0xf] %v732
        %741 = vrot.lane.b32.xlu0 %v269, 65
        %v742 = vpop.permute.xlu0 %741
        %743 = vrot.lane.b32.xlu0 %v270, 65
        %v744 = vpop.permute.xlu0 %743
        %745 = vrot.lane.b32.xlu0 %v271, 65
        %v746 = vpop.permute.xlu0 %745
        %747 = vrot.lane.b32.xlu0 %v272, 65
        %v748 = vpop.permute.xlu0 %747
        %v749 = vrot.slane %v742, 4
        %v750 = vrot.slane %v744, 4
        %v751 = vrot.slane %v746, 4
        %v752 = vrot.slane %v748, 4
        %v753 = vsel %vm293, %v749, %v750
        %vm754 = vcmask 531456
        %v755 = vsel %vm754, %v742, %v753
        %v756 = vsel %vm754, %v744, %v750
        %v757 = vsel %vm293, %v751, %v752
        %v758 = vsel %vm754, %v746, %v757
        %v759 = vsel %vm754, %v748, %v752
        %764 = vst [vmem:[#allocation2 + $0x1b0] sm:$0xff] %v755
        %765 = vst [vmem:[#allocation2 + $0x1b8] sm:$0xf] %v756
        %766 = vst [vmem:[#allocation2 + $0x1bc] sm:$0xff] %v758
        %767 = vst [vmem:[#allocation2 + $0x1c4] sm:$0xf] %v759
        %768 = vrot.lane.b32.xlu0 %v269, 64
        %v769 = vpop.permute.xlu0 %768
        %770 = vrot.lane.b32.xlu0 %v270, 64
        %v771 = vpop.permute.xlu0 %770
        %772 = vrot.lane.b32.xlu0 %v271, 64
        %v773 = vpop.permute.xlu0 %772
        %774 = vrot.lane.b32.xlu0 %v272, 64
        %v775 = vpop.permute.xlu0 %774
        %v776 = vrot.slane %v769, 4
        %v777 = vrot.slane %v771, 4
        %v778 = vrot.slane %v773, 4
        %v779 = vrot.slane %v775, 4
        %v780 = vsel %vm293, %v776, %v777
        %vm781 = vcmask 523264
        %v782 = vsel %vm781, %v769, %v780
        %v783 = vsel %vm781, %v771, %v777
        %v784 = vsel %vm293, %v778, %v779
        %v785 = vsel %vm781, %v773, %v784
        %v786 = vsel %vm781, %v775, %v779
        %791 = vst [vmem:[#allocation2 + $0x1c8] sm:$0xff] %v782
        %792 = vst [vmem:[#allocation2 + $0x1d0] sm:$0xf] %v783
        %793 = vst [vmem:[#allocation2 + $0x1d4] sm:$0xff] %v785
        %794 = vst [vmem:[#allocation2 + $0x1dc] sm:$0xf] %v786
        %795 = vrot.lane.b32.xlu0 %v269, 48
        %v796 = vpop.permute.xlu0 %795
        %797 = vrot.lane.b32.xlu0 %v270, 48
        %v798 = vpop.permute.xlu0 %797
        %799 = vrot.lane.b32.xlu0 %v271, 48
        %v800 = vpop.permute.xlu0 %799
        %801 = vrot.lane.b32.xlu0 %v272, 48
        %v802 = vpop.permute.xlu0 %801
        %v803 = vrot.slane %v796, 4
        %v804 = vrot.slane %v798, 4
        %v805 = vrot.slane %v800, 4
        %v806 = vrot.slane %v802, 4
        %v807 = vsel %vm293, %v803, %v804
        %vm808 = vcmask 392192
        %v809 = vsel %vm808, %v796, %v807
        %v810 = vsel %vm808, %v798, %v804
        %v811 = vsel %vm293, %v805, %v806
        %v812 = vsel %vm808, %v800, %v811
        %v813 = vsel %vm808, %v802, %v806
        %818 = vst [vmem:[#allocation2 + $0x1e0] sm:$0xff] %v809
        %819 = vst [vmem:[#allocation2 + $0x1e8] sm:$0xf] %v810
        %820 = vst [vmem:[#allocation2 + $0x1ec] sm:$0xff] %v812
        %821 = vst [vmem:[#allocation2 + $0x1f4] sm:$0xf] %v813
        %822 = vrot.lane.b32.xlu0 %v269, 47
        %v823 = vpop.permute.xlu0 %822
        %824 = vrot.lane.b32.xlu0 %v270, 47
        %v825 = vpop.permute.xlu0 %824
        %826 = vrot.lane.b32.xlu0 %v271, 47
        %v827 = vpop.permute.xlu0 %826
        %828 = vrot.lane.b32.xlu0 %v272, 47
        %v829 = vpop.permute.xlu0 %828
        %v830 = vrot.slane %v823, 4
        %v831 = vrot.slane %v825, 4
        %v832 = vrot.slane %v827, 4
        %v833 = vrot.slane %v829, 4
        %v834 = vsel %vm293, %v830, %v831
        %vm835 = vcmask 384000
        %v836 = vsel %vm835, %v823, %v834
        %v837 = vsel %vm835, %v825, %v831
        %v838 = vsel %vm293, %v832, %v833
        %v839 = vsel %vm835, %v827, %v838
        %v840 = vsel %vm835, %v829, %v833
        %845 = vst [vmem:[#allocation2 + $0x1f8] sm:$0xff] %v836
        %846 = vst [vmem:[#allocation2 + $0x200] sm:$0xf] %v837
        %847 = vst [vmem:[#allocation2 + $0x204] sm:$0xff] %v839
        %848 = vst [vmem:[#allocation2 + $0x20c] sm:$0xf] %v840
        %849 = vrot.lane.b32.xlu0 %v269, 46
        %v850 = vpop.permute.xlu0 %849
        %851 = vrot.lane.b32.xlu0 %v270, 46
        %v852 = vpop.permute.xlu0 %851
        %853 = vrot.lane.b32.xlu0 %v271, 46
        %v854 = vpop.permute.xlu0 %853
        %855 = vrot.lane.b32.xlu0 %v272, 46
        %v856 = vpop.permute.xlu0 %855
        %v857 = vrot.slane %v850, 4
        %v858 = vrot.slane %v852, 4
        %v859 = vrot.slane %v854, 4
        %v860 = vrot.slane %v856, 4
        %v861 = vsel %vm293, %v857, %v858
        %vm862 = vcmask 375808
        %v863 = vsel %vm862, %v850, %v861
        %v864 = vsel %vm862, %v852, %v858
        %v865 = vsel %vm293, %v859, %v860
        %v866 = vsel %vm862, %v854, %v865
        %v867 = vsel %vm862, %v856, %v860
        %872 = vst [vmem:[#allocation2 + $0x210] sm:$0xff] %v863
        %873 = vst [vmem:[#allocation2 + $0x218] sm:$0xf] %v864
        %874 = vst [vmem:[#allocation2 + $0x21c] sm:$0xff] %v866
        %875 = vst [vmem:[#allocation2 + $0x224] sm:$0xf] %v867
        %876 = vrot.lane.b32.xlu0 %v269, 45
        %v877 = vpop.permute.xlu0 %876
        %878 = vrot.lane.b32.xlu0 %v270, 45
        %v879 = vpop.permute.xlu0 %878
        %880 = vrot.lane.b32.xlu0 %v271, 45
        %v881 = vpop.permute.xlu0 %880
        %882 = vrot.lane.b32.xlu0 %v272, 45
        %v883 = vpop.permute.xlu0 %882
        %v884 = vrot.slane %v877, 4
        %v885 = vrot.slane %v879, 4
        %v886 = vrot.slane %v881, 4
        %v887 = vrot.slane %v883, 4
        %v888 = vsel %vm293, %v884, %v885
        %vm889 = vcmask 367616
        %v890 = vsel %vm889, %v877, %v888
        %v891 = vsel %vm889, %v879, %v885
        %v892 = vsel %vm293, %v886, %v887
        %v893 = vsel %vm889, %v881, %v892
        %v894 = vsel %vm889, %v883, %v887
        %899 = vst [vmem:[#allocation2 + $0x228] sm:$0xff] %v890
        %900 = vst [vmem:[#allocation2 + $0x230] sm:$0xf] %v891
        %901 = vst [vmem:[#allocation2 + $0x234] sm:$0xff] %v893
        %902 = vst [vmem:[#allocation2 + $0x23c] sm:$0xf] %v894
        %903 = vrot.lane.b32.xlu0 %v269, 44
        %v904 = vpop.permute.xlu0 %903
        %905 = vrot.lane.b32.xlu0 %v270, 44
        %v906 = vpop.permute.xlu0 %905
        %907 = vrot.lane.b32.xlu0 %v271, 44
        %v908 = vpop.permute.xlu0 %907
        %909 = vrot.lane.b32.xlu0 %v272, 44
        %v910 = vpop.permute.xlu0 %909
        %v911 = vrot.slane %v904, 4
        %v912 = vrot.slane %v906, 4
        %v913 = vrot.slane %v908, 4
        %v914 = vrot.slane %v910, 4
        %v915 = vsel %vm293, %v911, %v912
        %vm916 = vcmask 359424
        %v917 = vsel %vm916, %v904, %v915
        %v918 = vsel %vm916, %v906, %v912
        %v919 = vsel %vm293, %v913, %v914
        %v920 = vsel %vm916, %v908, %v919
        %v921 = vsel %vm916, %v910, %v914
        %926 = vst [vmem:[#allocation2 + $0x240] sm:$0xff] %v917
        %927 = vst [vmem:[#allocation2 + $0x248] sm:$0xf] %v918
        %928 = vst [vmem:[#allocation2 + $0x24c] sm:$0xff] %v920
        %929 = vst [vmem:[#allocation2 + $0x254] sm:$0xf] %v921
        %v930 = vld [vmem:[%s2] sm:$0xff]
        %v931 = vld [vmem:[%s2 + $0x8] sm:$0xff]
        %v932 = vld [vmem:[%s2 + $0x10] sm:$0xff]
        %v933 = vld [vmem:[%s2 + $0x18] sm:$0xff]
        %v934 = vld [vmem:[%s2 + $0x20] sm:$0xff]
        %v935 = vld [vmem:[%s2 + $0x28] sm:$0xff]
        %v936 = vld [vmem:[%s2 + $0x30] sm:$0xff]
        %v937 = vld [vmem:[%s2 + $0x38] sm:$0xff]
        %v938 = vld [vmem:[#allocation2] sm:$0xff]
        %v939 = vld [vmem:[#allocation2 + $0x8] sm:$0xf]
        %v940 = vld [vmem:[#allocation2 + $0xc] sm:$0xff]
        %v941 = vld [vmem:[#allocation2 + $0x14] sm:$0xf]
        %v942 = vld [vmem:[#allocation2 + $0x18] sm:$0xff]
        %v943 = vld [vmem:[#allocation2 + $0x20] sm:$0xf]
        %v944 = vld [vmem:[#allocation2 + $0x24] sm:$0xff]
        %v945 = vld [vmem:[#allocation2 + $0x2c] sm:$0xf]
        %v946 = vld [vmem:[#allocation2 + $0x30] sm:$0xff]
        %v947 = vld [vmem:[#allocation2 + $0x38] sm:$0xf]
        %v948 = vld [vmem:[#allocation2 + $0x3c] sm:$0xff]
        %v949 = vld [vmem:[#allocation2 + $0x44] sm:$0xf]
        %v950 = vld [vmem:[#allocation2 + $0x48] sm:$0xff]
        %v951 = vld [vmem:[#allocation2 + $0x50] sm:$0xf]
        %v952 = vld [vmem:[#allocation2 + $0x54] sm:$0xff]
        %v953 = vld [vmem:[#allocation2 + $0x5c] sm:$0xf]
        %v954 = vld [vmem:[#allocation2 + $0x60] sm:$0xff]
        %v955 = vld [vmem:[#allocation2 + $0x68] sm:$0xf]
        %v956 = vld [vmem:[#allocation2 + $0x6c] sm:$0xff]
        %v957 = vld [vmem:[#allocation2 + $0x74] sm:$0xf]
        %v958 = vld [vmem:[#allocation2 + $0x78] sm:$0xff]
        %v959 = vld [vmem:[#allocation2 + $0x80] sm:$0xf]
        %v960 = vld [vmem:[#allocation2 + $0x84] sm:$0xff]
        %v961 = vld [vmem:[#allocation2 + $0x8c] sm:$0xf]
        %v962 = vld [vmem:[#allocation2 + $0x90] sm:$0xff]
        %v963 = vld [vmem:[#allocation2 + $0x98] sm:$0xf]
        %v964 = vld [vmem:[#allocation2 + $0x9c] sm:$0xff]
        %v965 = vld [vmem:[#allocation2 + $0xa4] sm:$0xf]
        %v966 = vld [vmem:[#allocation2 + $0xa8] sm:$0xff]
        %v967 = vld [vmem:[#allocation2 + $0xb0] sm:$0xf]
        %v968 = vld [vmem:[#allocation2 + $0xb4] sm:$0xff]
        %v969 = vld [vmem:[#allocation2 + $0xbc] sm:$0xf]
        %v970 = vld [vmem:[#allocation2 + $0xc0] sm:$0xff]
        %v971 = vld [vmem:[#allocation2 + $0xc8] sm:$0xf]
        %v972 = vld [vmem:[#allocation2 + $0xcc] sm:$0xff]
        %v973 = vld [vmem:[#allocation2 + $0xd4] sm:$0xf]
        %v974 = vld [vmem:[#allocation2 + $0xd8] sm:$0xff]
        %v975 = vld [vmem:[#allocation2 + $0xe0] sm:$0xf]
        %v976 = vld [vmem:[#allocation2 + $0xe4] sm:$0xff]
        %v977 = vld [vmem:[#allocation2 + $0xec] sm:$0xf]
        %v978 = vld [vmem:[#allocation2 + $0xf0] sm:$0xff]
        %v979 = vld [vmem:[#allocation2 + $0xf8] sm:$0xf]
        %v980 = vld [vmem:[#allocation2 + $0xfc] sm:$0xff]
        %v981 = vld [vmem:[#allocation2 + $0x104] sm:$0xf]
        %v982 = vld [vmem:[#allocation2 + $0x108] sm:$0xff]
        %v983 = vld [vmem:[#allocation2 + $0x110] sm:$0xf]
        %v984 = vld [vmem:[#allocation2 + $0x114] sm:$0xff]
        %v985 = vld [vmem:[#allocation2 + $0x11c] sm:$0xf]
        %v986 = vld [vmem:[#allocation2 + $0x120] sm:$0xff]
        %v987 = vld [vmem:[#allocation2 + $0x128] sm:$0xf]
        %v988 = vld [vmem:[#allocation2 + $0x12c] sm:$0xff]
        %v989 = vld [vmem:[#allocation2 + $0x134] sm:$0xf]
        %v990 = vld [vmem:[#allocation2 + $0x138] sm:$0xff]
        %v991 = vld [vmem:[#allocation2 + $0x140] sm:$0xf]
        %v992 = vld [vmem:[#allocation2 + $0x144] sm:$0xff]
        %v993 = vld [vmem:[#allocation2 + $0x14c] sm:$0xf]
        %v994 = vld [vmem:[#allocation2 + $0x150] sm:$0xff]
        %v995 = vld [vmem:[#allocation2 + $0x158] sm:$0xf]
        %v996 = vld [vmem:[#allocation2 + $0x15c] sm:$0xff]
        %v997 = vld [vmem:[#allocation2 + $0x164] sm:$0xf]
        %v998 = vld [vmem:[#allocation2 + $0x168] sm:$0xff]
        %v999 = vld [vmem:[#allocation2 + $0x170] sm:$0xf]
        %v1000 = vld [vmem:[#allocation2 + $0x174] sm:$0xff]
        %v1001 = vld [vmem:[#allocation2 + $0x17c] sm:$0xf]
        %v1002 = vld [vmem:[#allocation2 + $0x180] sm:$0xff]
        %v1003 = vld [vmem:[#allocation2 + $0x188] sm:$0xf]
        %v1004 = vld [vmem:[#allocation2 + $0x18c] sm:$0xff]
        %v1005 = vld [vmem:[#allocation2 + $0x194] sm:$0xf]
        %v1006 = vld [vmem:[#allocation2 + $0x198] sm:$0xff]
        %v1007 = vld [vmem:[#allocation2 + $0x1a0] sm:$0xf]
        %v1008 = vld [vmem:[#allocation2 + $0x1a4] sm:$0xff]
        %v1009 = vld [vmem:[#allocation2 + $0x1ac] sm:$0xf]
        %v1010 = vld [vmem:[#allocation2 + $0x1b0] sm:$0xff]
        %v1011 = vld [vmem:[#allocation2 + $0x1b8] sm:$0xf]
        %v1012 = vld [vmem:[#allocation2 + $0x1bc] sm:$0xff]
        %v1013 = vld [vmem:[#allocation2 + $0x1c4] sm:$0xf]
        %v1014 = vld [vmem:[#allocation2 + $0x1c8] sm:$0xff]
        %v1015 = vld [vmem:[#allocation2 + $0x1d0] sm:$0xf]
        %v1016 = vld [vmem:[#allocation2 + $0x1d4] sm:$0xff]
        %v1017 = vld [vmem:[#allocation2 + $0x1dc] sm:$0xf]
        %v1018 = vld [vmem:[#allocation2 + $0x1e0] sm:$0xff]
        %v1019 = vld [vmem:[#allocation2 + $0x1e8] sm:$0xf]
        %v1020 = vld [vmem:[#allocation2 + $0x1ec] sm:$0xff]
        %v1021 = vld [vmem:[#allocation2 + $0x1f4] sm:$0xf]
        %v1022 = vld [vmem:[#allocation2 + $0x1f8] sm:$0xff]
        %v1023 = vld [vmem:[#allocation2 + $0x200] sm:$0xf]
        %v1024 = vld [vmem:[#allocation2 + $0x204] sm:$0xff]
        %v1025 = vld [vmem:[#allocation2 + $0x20c] sm:$0xf]
        %v1026 = vld [vmem:[#allocation2 + $0x210] sm:$0xff]
        %v1027 = vld [vmem:[#allocation2 + $0x218] sm:$0xf]
        %v1028 = vld [vmem:[#allocation2 + $0x21c] sm:$0xff]
        %v1029 = vld [vmem:[#allocation2 + $0x224] sm:$0xf]
        %v1030 = vld [vmem:[#allocation2 + $0x228] sm:$0xff]
        %v1031 = vld [vmem:[#allocation2 + $0x230] sm:$0xf]
        %v1032 = vld [vmem:[#allocation2 + $0x234] sm:$0xff]
        %v1033 = vld [vmem:[#allocation2 + $0x23c] sm:$0xf]
        %v1034 = vld [vmem:[#allocation2 + $0x240] sm:$0xff]
        %v1035 = vld [vmem:[#allocation2 + $0x248] sm:$0xf]
        %v1036 = vld [vmem:[#allocation2 + $0x24c] sm:$0xff]
        %v1037 = vld [vmem:[#allocation2 + $0x254] sm:$0xf]
        %v1046 = vunpack.c.l.b16 %v930
        %v1047 = vunpack.c.h.b16 %v930
        %v1048 = vunpack.c.l.b16 %v931
        %v1049 = vunpack.c.h.b16 %v931
        %v1050 = vunpack.c.l.b16 %v932
        %v1051 = vunpack.c.h.b16 %v932
        %v1052 = vunpack.c.l.b16 %v933
        %v1053 = vunpack.c.h.b16 %v933
        %v1054 = vunpack.c.l.b16 %v934
        %v1055 = vunpack.c.h.b16 %v934
        %v1056 = vunpack.c.l.b16 %v935
        %v1057 = vunpack.c.h.b16 %v935
        %v1058 = vunpack.c.l.b16 %v936
        %v1059 = vunpack.c.h.b16 %v936
        %v1060 = vunpack.c.l.b16 %v937
        %v1061 = vunpack.c.h.b16 %v937
        %v1062 = vpack.c.b16 %v1050, %v1046
        %v1063 = vpack.c.b16 %v1051, %v1047
        %v1064 = vpack.c.b16 %v1052, %v1048
        %v1065 = vpack.c.b16 %v1053, %v1049
        %v1066 = vpack.c.b16 %v1058, %v1054
        %v1067 = vpack.c.b16 %v1059, %v1055
        %v1068 = vpack.c.b16 %v1060, %v1056
        %v1069 = vpack.c.b16 %v1061, %v1057
        %v1176 = vunpack.c.l.b16 %v938
        %v1177 = vunpack.c.h.b16 %v938
        %v1178 = vunpack.c.l.b16 %v939
        %v1179 = vunpack.c.l.b16 %v940
        %v1180 = vunpack.c.h.b16 %v940
        %v1181 = vunpack.c.l.b16 %v941
        %v1182 = vunpack.c.l.b16 %v942
        %v1183 = vunpack.c.h.b16 %v942
        %v1184 = vunpack.c.l.b16 %v943
        %v1185 = vunpack.c.l.b16 %v944
        %v1186 = vunpack.c.h.b16 %v944
        %v1187 = vunpack.c.l.b16 %v945
        %v1188 = vunpack.c.l.b16 %v946
        %v1189 = vunpack.c.h.b16 %v946
        %v1190 = vunpack.c.l.b16 %v947
        %v1191 = vunpack.c.l.b16 %v948
        %v1192 = vunpack.c.h.b16 %v948
        %v1193 = vunpack.c.l.b16 %v949
        %v1194 = vunpack.c.l.b16 %v950
        %v1195 = vunpack.c.h.b16 %v950
        %v1196 = vunpack.c.l.b16 %v951
        %v1197 = vunpack.c.l.b16 %v952
        %v1198 = vunpack.c.h.b16 %v952
        %v1199 = vunpack.c.l.b16 %v953
        %v1200 = vunpack.c.l.b16 %v954
        %v1201 = vunpack.c.h.b16 %v954
        %v1202 = vunpack.c.l.b16 %v955
        %v1203 = vunpack.c.l.b16 %v956
        %v1204 = vunpack.c.h.b16 %v956
        %v1205 = vunpack.c.l.b16 %v957
        %v1206 = vunpack.c.l.b16 %v958
        %v1207 = vunpack.c.h.b16 %v958
        %v1208 = vunpack.c.l.b16 %v959
        %v1209 = vunpack.c.l.b16 %v960
        %v1210 = vunpack.c.h.b16 %v960
        %v1211 = vunpack.c.l.b16 %v961
        %v1212 = vunpack.c.l.b16 %v962
        %v1213 = vunpack.c.h.b16 %v962
        %v1214 = vunpack.c.l.b16 %v963
        %v1215 = vunpack.c.l.b16 %v964
        %v1216 = vunpack.c.h.b16 %v964
        %v1217 = vunpack.c.l.b16 %v965
        %v1218 = vunpack.c.l.b16 %v966
        %v1219 = vunpack.c.h.b16 %v966
        %v1220 = vunpack.c.l.b16 %v967
        %v1221 = vunpack.c.l.b16 %v968
        %v1222 = vunpack.c.h.b16 %v968
        %v1223 = vunpack.c.l.b16 %v969
        %v1224 = vunpack.c.l.b16 %v970
        %v1225 = vunpack.c.h.b16 %v970
        %v1226 = vunpack.c.l.b16 %v971
        %v1227 = vunpack.c.l.b16 %v972
        %v1228 = vunpack.c.h.b16 %v972
        %v1229 = vunpack.c.l.b16 %v973
        %v1230 = vunpack.c.l.b16 %v974
        %v1231 = vunpack.c.h.b16 %v974
        %v1232 = vunpack.c.l.b16 %v975
        %v1233 = vunpack.c.l.b16 %v976
        %v1234 = vunpack.c.h.b16 %v976
        %v1235 = vunpack.c.l.b16 %v977
        %v1236 = vunpack.c.l.b16 %v978
        %v1237 = vunpack.c.h.b16 %v978
        %v1238 = vunpack.c.l.b16 %v979
        %v1239 = vunpack.c.l.b16 %v980
        %v1240 = vunpack.c.h.b16 %v980
        %v1241 = vunpack.c.l.b16 %v981
        %v1242 = vunpack.c.l.b16 %v982
        %v1243 = vunpack.c.h.b16 %v982
        %v1244 = vunpack.c.l.b16 %v983
        %v1245 = vunpack.c.l.b16 %v984
        %v1246 = vunpack.c.h.b16 %v984
        %v1247 = vunpack.c.l.b16 %v985
        %v1248 = vunpack.c.l.b16 %v986
        %v1249 = vunpack.c.h.b16 %v986
        %v1250 = vunpack.c.l.b16 %v987
        %v1251 = vunpack.c.l.b16 %v988
        %v1252 = vunpack.c.h.b16 %v988
        %v1253 = vunpack.c.l.b16 %v989
        %v1254 = vunpack.c.l.b16 %v990
        %v1255 = vunpack.c.h.b16 %v990
        %v1256 = vunpack.c.l.b16 %v991
        %v1257 = vunpack.c.l.b16 %v992
        %v1258 = vunpack.c.h.b16 %v992
        %v1259 = vunpack.c.l.b16 %v993
        %v1260 = vunpack.c.l.b16 %v994
        %v1261 = vunpack.c.h.b16 %v994
        %v1262 = vunpack.c.l.b16 %v995
        %v1263 = vunpack.c.l.b16 %v996
        %v1264 = vunpack.c.h.b16 %v996
        %v1265 = vunpack.c.l.b16 %v997
        %v1266 = vunpack.c.l.b16 %v998
        %v1267 = vunpack.c.h.b16 %v998
        %v1268 = vunpack.c.l.b16 %v999
        %v1269 = vunpack.c.l.b16 %v1000
        %v1270 = vunpack.c.h.b16 %v1000
        %v1271 = vunpack.c.l.b16 %v1001
        %v1272 = vunpack.c.l.b16 %v1002
        %v1273 = vunpack.c.h.b16 %v1002
        %v1274 = vunpack.c.l.b16 %v1003
        %v1275 = vunpack.c.l.b16 %v1004
        %v1276 = vunpack.c.h.b16 %v1004
        %v1277 = vunpack.c.l.b16 %v1005
        %v1278 = vunpack.c.l.b16 %v1006
        %v1279 = vunpack.c.h.b16 %v1006
        %v1280 = vunpack.c.l.b16 %v1007
        %v1281 = vunpack.c.l.b16 %v1008
        %v1282 = vunpack.c.h.b16 %v1008
        %v1283 = vunpack.c.l.b16 %v1009
        %v1284 = vunpack.c.l.b16 %v1010
        %v1285 = vunpack.c.h.b16 %v1010
        %v1286 = vunpack.c.l.b16 %v1011
        %v1287 = vunpack.c.l.b16 %v1012
        %v1288 = vunpack.c.h.b16 %v1012
        %v1289 = vunpack.c.l.b16 %v1013
        %v1290 = vunpack.c.l.b16 %v1014
        %v1291 = vunpack.c.h.b16 %v1014
        %v1292 = vunpack.c.l.b16 %v1015
        %v1293 = vunpack.c.l.b16 %v1016
        %v1294 = vunpack.c.h.b16 %v1016
        %v1295 = vunpack.c.l.b16 %v1017
        %v1296 = vunpack.c.l.b16 %v1018
        %v1297 = vunpack.c.h.b16 %v1018
        %v1298 = vunpack.c.l.b16 %v1019
        %v1299 = vunpack.c.l.b16 %v1020
        %v1300 = vunpack.c.h.b16 %v1020
        %v1301 = vunpack.c.l.b16 %v1021
        %v1302 = vunpack.c.l.b16 %v1022
        %v1303 = vunpack.c.h.b16 %v1022
        %v1304 = vunpack.c.l.b16 %v1023
        %v1305 = vunpack.c.l.b16 %v1024
        %v1306 = vunpack.c.h.b16 %v1024
        %v1307 = vunpack.c.l.b16 %v1025
        %v1308 = vunpack.c.l.b16 %v1026
        %v1309 = vunpack.c.h.b16 %v1026
        %v1310 = vunpack.c.l.b16 %v1027
        %v1311 = vunpack.c.l.b16 %v1028
        %v1312 = vunpack.c.h.b16 %v1028
        %v1313 = vunpack.c.l.b16 %v1029
        %v1314 = vunpack.c.l.b16 %v1030
        %v1315 = vunpack.c.h.b16 %v1030
        %v1316 = vunpack.c.l.b16 %v1031
        %v1317 = vunpack.c.l.b16 %v1032
        %v1318 = vunpack.c.h.b16 %v1032
        %v1319 = vunpack.c.l.b16 %v1033
        %v1320 = vunpack.c.l.b16 %v1034
        %v1321 = vunpack.c.h.b16 %v1034
        %v1322 = vunpack.c.l.b16 %v1035
        %v1323 = vunpack.c.l.b16 %v1036
        %v1324 = vunpack.c.h.b16 %v1036
        %v1325 = vunpack.c.l.b16 %v1037
        %v1326 = vpack.c.b16 %v1179, %v1176
        %v1327 = vpack.c.b16 %v1180, %v1177
        %v1328 = vpack.c.b16 %v1181, %v1178
        %v1329 = vpack.c.b16 %v1185, %v1182
        %v1330 = vpack.c.b16 %v1186, %v1183
        %v1331 = vpack.c.b16 %v1187, %v1184
        %v1332 = vpack.c.b16 %v1191, %v1188
        %v1333 = vpack.c.b16 %v1192, %v1189
        %v1334 = vpack.c.b16 %v1193, %v1190
        %v1335 = vpack.c.b16 %v1197, %v1194
        %v1336 = vpack.c.b16 %v1198, %v1195
        %v1337 = vpack.c.b16 %v1199, %v1196
        %v1338 = vpack.c.b16 %v1203, %v1200
        %v1339 = vpack.c.b16 %v1204, %v1201
        %v1340 = vpack.c.b16 %v1205, %v1202
        %v1341 = vpack.c.b16 %v1209, %v1206
        %v1342 = vpack.c.b16 %v1210, %v1207
        %v1343 = vpack.c.b16 %v1211, %v1208
        %v1344 = vpack.c.b16 %v1215, %v1212
        %v1345 = vpack.c.b16 %v1216, %v1213
        %v1346 = vpack.c.b16 %v1217, %v1214
        %v1347 = vpack.c.b16 %v1221, %v1218
        %v1348 = vpack.c.b16 %v1222, %v1219
        %v1349 = vpack.c.b16 %v1223, %v1220
        %v1350 = vpack.c.b16 %v1227, %v1224
        %v1351 = vpack.c.b16 %v1228, %v1225
        %v1352 = vpack.c.b16 %v1229, %v1226
        %v1353 = vpack.c.b16 %v1233, %v1230
        %v1354 = vpack.c.b16 %v1234, %v1231
        %v1355 = vpack.c.b16 %v1235, %v1232
        %v1356 = vpack.c.b16 %v1239, %v1236
        %v1357 = vpack.c.b16 %v1240, %v1237
        %v1358 = vpack.c.b16 %v1241, %v1238
        %v1359 = vpack.c.b16 %v1245, %v1242
        %v1360 = vpack.c.b16 %v1246, %v1243
        %v1361 = vpack.c.b16 %v1247, %v1244
        %v1362 = vpack.c.b16 %v1251, %v1248
        %v1363 = vpack.c.b16 %v1252, %v1249
        %v1364 = vpack.c.b16 %v1253, %v1250
        %v1365 = vpack.c.b16 %v1257, %v1254
        %v1366 = vpack.c.b16 %v1258, %v1255
        %v1367 = vpack.c.b16 %v1259, %v1256
        %v1368 = vpack.c.b16 %v1263, %v1260
        %v1369 = vpack.c.b16 %v1264, %v1261
        %v1370 = vpack.c.b16 %v1265, %v1262
        %v1371 = vpack.c.b16 %v1269, %v1266
        %v1372 = vpack.c.b16 %v1270, %v1267
        %v1373 = vpack.c.b16 %v1271, %v1268
        %v1374 = vpack.c.b16 %v1275, %v1272
        %v1375 = vpack.c.b16 %v1276, %v1273
        %v1376 = vpack.c.b16 %v1277, %v1274
        %v1377 = vpack.c.b16 %v1281, %v1278
        %v1378 = vpack.c.b16 %v1282, %v1279
        %v1379 = vpack.c.b16 %v1283, %v1280
        %v1380 = vpack.c.b16 %v1287, %v1284
        %v1381 = vpack.c.b16 %v1288, %v1285
        %v1382 = vpack.c.b16 %v1289, %v1286
        %v1383 = vpack.c.b16 %v1293, %v1290
        %v1384 = vpack.c.b16 %v1294, %v1291
        %v1385 = vpack.c.b16 %v1295, %v1292
        %v1386 = vpack.c.b16 %v1299, %v1296
        %v1387 = vpack.c.b16 %v1300, %v1297
        %v1388 = vpack.c.b16 %v1301, %v1298
        %v1389 = vpack.c.b16 %v1305, %v1302
        %v1390 = vpack.c.b16 %v1306, %v1303
        %v1391 = vpack.c.b16 %v1307, %v1304
        %v1392 = vpack.c.b16 %v1311, %v1308
        %v1393 = vpack.c.b16 %v1312, %v1309
        %v1394 = vpack.c.b16 %v1313, %v1310
        %v1395 = vpack.c.b16 %v1317, %v1314
        %v1396 = vpack.c.b16 %v1318, %v1315
        %v1397 = vpack.c.b16 %v1319, %v1316
        %v1398 = vpack.c.b16 %v1323, %v1320
        %v1399 = vpack.c.b16 %v1324, %v1321
        %v1400 = vpack.c.b16 %v1325, %v1322
        %vm1476 = vcmask 130048
        %v1478 = vsel %vm1476, %v1065, 0
        %v1481 = vsel %vm1476, %v1069, 0
        %1483 = vmatpush.bf16.msra.mxu0 %v1347
        %1484 = vmatpush.bf16.msra.mxu0 %v1344
        %1485 = vmatpush.bf16.msra.mxu0 %v1341
        %1486 = vmatpush.bf16.msra.mxu0 %v1338
        %1487 = vmatpush.bf16.msra.mxu0 %v1335
        %1488 = vmatpush.bf16.msra.mxu0 %v1332
        %1489 = vmatpush.bf16.msra.mxu0 %v1329
        %1490 = vmatpush.bf16.msra.mxu0 %v1326
        %1491 = vmatmul.bf16.gmra.mxu0 %v1062
        %v1492 = vpop.f32.mrf.mxu0
        %v1493 = vadd.f32 0.0, %v1492
        %v1494 = vpop.f32.mrf.mxu0
        %v1495 = vadd.f32 0.0, %v1494
        %1496 = vmatmul.bf16.gmra.mxu0 %v1066
        %v1497 = vpop.f32.mrf.mxu0
        %v1498 = vadd.f32 0.0, %v1497
        %v1499 = vpop.f32.mrf.mxu0
        %v1500 = vadd.f32 0.0, %v1499
        %1501 = vdwg.mxu0
        %1502 = vmatpush.bf16.msra.mxu0 %v1371
        %1503 = vmatpush.bf16.msra.mxu0 %v1368
        %1504 = vmatpush.bf16.msra.mxu0 %v1365
        %1505 = vmatpush.bf16.msra.mxu0 %v1362
        %1506 = vmatpush.bf16.msra.mxu0 %v1359
        %1507 = vmatpush.bf16.msra.mxu0 %v1356
        %1508 = vmatpush.bf16.msra.mxu0 %v1353
        %1509 = vmatpush.bf16.msra.mxu0 %v1350
        %1510 = vmatmul.bf16.gmra.mxu0 %v1063
        %v1511 = vpop.f32.mrf.mxu0
        %v1512 = vadd.f32 %v1493, %v1511
        %v1513 = vpop.f32.mrf.mxu0
        %v1514 = vadd.f32 %v1495, %v1513
        %1515 = vmatmul.bf16.gmra.mxu0 %v1067
        %v1516 = vpop.f32.mrf.mxu0
        %v1517 = vadd.f32 %v1498, %v1516
        %v1518 = vpop.f32.mrf.mxu0
        %v1519 = vadd.f32 %v1500, %v1518
        %1520 = vdwg.mxu0
        %1521 = vmatpush.bf16.msra.mxu0 %v1395
        %1522 = vmatpush.bf16.msra.mxu0 %v1392
        %1523 = vmatpush.bf16.msra.mxu0 %v1389
        %1524 = vmatpush.bf16.msra.mxu0 %v1386
        %1525 = vmatpush.bf16.msra.mxu0 %v1383
        %1526 = vmatpush.bf16.msra.mxu0 %v1380
        %1527 = vmatpush.bf16.msra.mxu0 %v1377
        %1528 = vmatpush.bf16.msra.mxu0 %v1374
        %1529 = vmatmul.bf16.gmra.mxu0 %v1064
        %v1530 = vpop.f32.mrf.mxu0
        %v1531 = vadd.f32 %v1512, %v1530
        %v1532 = vpop.f32.mrf.mxu0
        %v1533 = vadd.f32 %v1514, %v1532
        %1534 = vmatmul.bf16.gmra.mxu0 %v1068
        %v1535 = vpop.f32.mrf.mxu0
        %v1536 = vadd.f32 %v1517, %v1535
        %v1537 = vpop.f32.mrf.mxu0
        %v1538 = vadd.f32 %v1519, %v1537
        %1539 = vdwg.mxu0
        %1540 = vmatpush.bf16.msra.mxu0 0
        %1541 = vmatpush.bf16.msra.mxu0 0
        %1542 = vmatpush.bf16.msra.mxu0 0
        %1543 = vmatpush.bf16.msra.mxu0 0
        %1544 = vmatpush.bf16.msra.mxu0 0
        %1545 = vmatpush.bf16.msra.mxu0 0
        %1546 = vmatpush.bf16.msra.mxu0 0
        %1547 = vmatpush.bf16.msra.mxu0 %v1398
        %1548 = vmatmul.bf16.gmra.mxu0 %v1478
        %v1549 = vpop.f32.mrf.mxu0
        %v1550 = vadd.f32 %v1531, %v1549
        %v1551 = vpop.f32.mrf.mxu0
        %v1552 = vadd.f32 %v1533, %v1551
        %1553 = vmatmul.bf16.gmra.mxu0 %v1481
        %v1554 = vpop.f32.mrf.mxu0
        %v1555 = vadd.f32 %v1536, %v1554
        %v1556 = vpop.f32.mrf.mxu0
        %v1557 = vadd.f32 %v1538, %v1556
        %1558 = vdwg.mxu0
        %1559 = vmatpush.bf16.msra.mxu0 %v1348
        %1560 = vmatpush.bf16.msra.mxu0 %v1345
        %1561 = vmatpush.bf16.msra.mxu0 %v1342
        %1562 = vmatpush.bf16.msra.mxu0 %v1339
        %1563 = vmatpush.bf16.msra.mxu0 %v1336
        %1564 = vmatpush.bf16.msra.mxu0 %v1333
        %1565 = vmatpush.bf16.msra.mxu0 %v1330
        %1566 = vmatpush.bf16.msra.mxu0 %v1327
        %1567 = vmatmul.bf16.gmra.mxu0 %v1062
        %v1568 = vpop.f32.mrf.mxu0
        %v1569 = vadd.f32 0.0, %v1568
        %v1570 = vpop.f32.mrf.mxu0
        %v1571 = vadd.f32 0.0, %v1570
        %1572 = vmatmul.bf16.gmra.mxu0 %v1066
        %v1573 = vpop.f32.mrf.mxu0
        %v1574 = vadd.f32 0.0, %v1573
        %v1575 = vpop.f32.mrf.mxu0
        %v1576 = vadd.f32 0.0, %v1575
        %1577 = vdwg.mxu0
        %1578 = vmatpush.bf16.msra.mxu0 %v1372
        %1579 = vmatpush.bf16.msra.mxu0 %v1369
        %1580 = vmatpush.bf16.msra.mxu0 %v1366
        %1581 = vmatpush.bf16.msra.mxu0 %v1363
        %1582 = vmatpush.bf16.msra.mxu0 %v1360
        %1583 = vmatpush.bf16.msra.mxu0 %v1357
        %1584 = vmatpush.bf16.msra.mxu0 %v1354
        %1585 = vmatpush.bf16.msra.mxu0 %v1351
        %1586 = vmatmul.bf16.gmra.mxu0 %v1063
        %v1587 = vpop.f32.mrf.mxu0
        %v1588 = vadd.f32 %v1569, %v1587
        %v1589 = vpop.f32.mrf.mxu0
        %v1590 = vadd.f32 %v1571, %v1589
        %1591 = vmatmul.bf16.gmra.mxu0 %v1067
        %v1592 = vpop.f32.mrf.mxu0
        %v1593 = vadd.f32 %v1574, %v1592
        %v1594 = vpop.f32.mrf.mxu0
        %v1595 = vadd.f32 %v1576, %v1594
        %1596 = vdwg.mxu0
        %1597 = vmatpush.bf16.msra.mxu0 %v1396
        %1598 = vmatpush.bf16.msra.mxu0 %v1393
        %1599 = vmatpush.bf16.msra.mxu0 %v1390
        %1600 = vmatpush.bf16.msra.mxu0 %v1387
        %1601 = vmatpush.bf16.msra.mxu0 %v1384
        %1602 = vmatpush.bf16.msra.mxu0 %v1381
        %1603 = vmatpush.bf16.msra.mxu0 %v1378
        %1604 = vmatpush.bf16.msra.mxu0 %v1375
        %1605 = vmatmul.bf16.gmra.mxu0 %v1064
        %v1606 = vpop.f32.mrf.mxu0
        %v1607 = vadd.f32 %v1588, %v1606
        %v1608 = vpop.f32.mrf.mxu0
        %v1609 = vadd.f32 %v1590, %v1608
        %1610 = vmatmul.bf16.gmra.mxu0 %v1068
        %v1611 = vpop.f32.mrf.mxu0
        %v1612 = vadd.f32 %v1593, %v1611
        %v1613 = vpop.f32.mrf.mxu0
        %v1614 = vadd.f32 %v1595, %v1613
        %1615 = vdwg.mxu0
        %1616 = vmatpush.bf16.msra.mxu0 0
        %1617 = vmatpush.bf16.msra.mxu0 0
        %1618 = vmatpush.bf16.msra.mxu0 0
        %1619 = vmatpush.bf16.msra.mxu0 0
        %1620 = vmatpush.bf16.msra.mxu0 0
        %1621 = vmatpush.bf16.msra.mxu0 0
        %1622 = vmatpush.bf16.msra.mxu0 0
        %1623 = vmatpush.bf16.msra.mxu0 %v1399
        %1624 = vmatmul.bf16.gmra.mxu0 %v1478
        %v1625 = vpop.f32.mrf.mxu0
        %v1626 = vadd.f32 %v1607, %v1625
        %v1627 = vpop.f32.mrf.mxu0
        %v1628 = vadd.f32 %v1609, %v1627
        %1629 = vmatmul.bf16.gmra.mxu0 %v1481
        %v1630 = vpop.f32.mrf.mxu0
        %v1631 = vadd.f32 %v1612, %v1630
        %v1632 = vpop.f32.mrf.mxu0
        %v1633 = vadd.f32 %v1614, %v1632
        %1634 = vdwg.mxu0
        %1635 = vmatpush.bf16.msra.mxu0 %v1349
        %1636 = vmatpush.bf16.msra.mxu0 %v1346
        %1637 = vmatpush.bf16.msra.mxu0 %v1343
        %1638 = vmatpush.bf16.msra.mxu0 %v1340
        %1639 = vmatpush.bf16.msra.mxu0 %v1337
        %1640 = vmatpush.bf16.msra.mxu0 %v1334
        %1641 = vmatpush.bf16.msra.mxu0 %v1331
        %1642 = vmatpush.bf16.msra.mxu0 %v1328
        %1643 = vmatmul.bf16.gmra.mxu0 %v1062
        %v1644 = vpop.f32.mrf.mxu0
        %v1645 = vadd.f32 0.0, %v1644
        %v1646 = vpop.f32.mrf.mxu0
        %v1647 = vadd.f32 0.0, %v1646
        %1648 = vmatmul.bf16.gmra.mxu0 %v1066
        %v1649 = vpop.f32.mrf.mxu0
        %v1650 = vadd.f32 0.0, %v1649
        %v1651 = vpop.f32.mrf.mxu0
        %v1652 = vadd.f32 0.0, %v1651
        %1653 = vdwg.mxu0
        %1654 = vmatpush.bf16.msra.mxu0 %v1373
        %1655 = vmatpush.bf16.msra.mxu0 %v1370
        %1656 = vmatpush.bf16.msra.mxu0 %v1367
        %1657 = vmatpush.bf16.msra.mxu0 %v1364
        %1658 = vmatpush.bf16.msra.mxu0 %v1361
        %1659 = vmatpush.bf16.msra.mxu0 %v1358
        %1660 = vmatpush.bf16.msra.mxu0 %v1355
        %1661 = vmatpush.bf16.msra.mxu0 %v1352
        %1662 = vmatmul.bf16.gmra.mxu0 %v1063
        %v1663 = vpop.f32.mrf.mxu0
        %v1664 = vadd.f32 %v1645, %v1663
        %v1665 = vpop.f32.mrf.mxu0
        %v1666 = vadd.f32 %v1647, %v1665
        %1667 = vmatmul.bf16.gmra.mxu0 %v1067
        %v1668 = vpop.f32.mrf.mxu0
        %v1669 = vadd.f32 %v1650, %v1668
        %v1670 = vpop.f32.mrf.mxu0
        %v1671 = vadd.f32 %v1652, %v1670
        %1672 = vdwg.mxu0
        %1673 = vmatpush.bf16.msra.mxu0 %v1397
        %1674 = vmatpush.bf16.msra.mxu0 %v1394
        %1675 = vmatpush.bf16.msra.mxu0 %v1391
        %1676 = vmatpush.bf16.msra.mxu0 %v1388
        %1677 = vmatpush.bf16.msra.mxu0 %v1385
        %1678 = vmatpush.bf16.msra.mxu0 %v1382
        %1679 = vmatpush.bf16.msra.mxu0 %v1379
        %1680 = vmatpush.bf16.msra.mxu0 %v1376
        %1681 = vmatmul.bf16.gmra.mxu0 %v1064
        %v1682 = vpop.f32.mrf.mxu0
        %v1683 = vadd.f32 %v1664, %v1682
        %v1684 = vpop.f32.mrf.mxu0
        %v1685 = vadd.f32 %v1666, %v1684
        %1686 = vmatmul.bf16.gmra.mxu0 %v1068
        %v1687 = vpop.f32.mrf.mxu0
        %v1688 = vadd.f32 %v1669, %v1687
        %v1689 = vpop.f32.mrf.mxu0
        %v1690 = vadd.f32 %v1671, %v1689
        %1691 = vdwg.mxu0
        %1692 = vmatpush.bf16.msra.mxu0 0
        %1693 = vmatpush.bf16.msra.mxu0 0
        %1694 = vmatpush.bf16.msra.mxu0 0
        %1695 = vmatpush.bf16.msra.mxu0 0
        %1696 = vmatpush.bf16.msra.mxu0 0
        %1697 = vmatpush.bf16.msra.mxu0 0
        %1698 = vmatpush.bf16.msra.mxu0 0
        %1699 = vmatpush.bf16.msra.mxu0 %v1400
        %1700 = vmatmul.bf16.gmra.mxu0 %v1478
        %v1701 = vpop.f32.mrf.mxu0
        %v1702 = vadd.f32 %v1683, %v1701
        %v1703 = vpop.f32.mrf.mxu0
        %v1704 = vadd.f32 %v1685, %v1703
        %1705 = vmatmul.bf16.gmra.mxu0 %v1481
        %v1706 = vpop.f32.mrf.mxu0
        %v1707 = vadd.f32 %v1688, %v1706
        %v1708 = vpop.f32.mrf.mxu0
        %v1709 = vadd.f32 %v1690, %v1708
        %1710 = vdwg.mxu0
        %v1711 = vstv %s267
        %vm1712 = vcmp.gt.f32.partialorder %v1550, %v1711
        %vm1713 = vcmp.gt.f32.partialorder %v1626, %v1711
        %vm1714 = vcmp.gt.f32.partialorder %v1702, %v1711
        %vm1715 = vcmp.gt.f32.partialorder %v1552, %v1711
        %vm1716 = vcmp.gt.f32.partialorder %v1628, %v1711
        %vm1717 = vcmp.gt.f32.partialorder %v1704, %v1711
        %vm1718 = vcmp.gt.f32.partialorder %v1555, %v1711
        %vm1719 = vcmp.gt.f32.partialorder %v1631, %v1711
        %vm1720 = vcmp.gt.f32.partialorder %v1707, %v1711
        %vm1721 = vcmp.gt.f32.partialorder %v1557, %v1711
        %vm1722 = vcmp.gt.f32.partialorder %v1633, %v1711
        %vm1723 = vcmp.gt.f32.partialorder %v1709, %v1711
        %v1724 = vsel %vm1712, 1, 0
        %v1725 = vsel %vm1713, 1, 0
        %v1726 = vsel %vm1714, 1, 0
        %v1727 = vsel %vm1715, 1, 0
        %v1728 = vsel %vm1716, 1, 0
        %v1729 = vsel %vm1717, 1, 0
        %v1730 = vsel %vm1718, 1, 0
        %v1731 = vsel %vm1719, 1, 0
        %v1732 = vsel %vm1720, 1, 0
        %v1733 = vsel %vm1721, 1, 0
        %v1734 = vsel %vm1722, 1, 0
        %v1735 = vsel %vm1723, 1, 0
        %v1736 = vcvt.s32.f32 %v1724
        %v1737 = vcvt.s32.f32 %v1725
        %v1738 = vcvt.s32.f32 %v1726
        %v1739 = vcvt.s32.f32 %v1727
        %v1740 = vcvt.s32.f32 %v1728
        %v1741 = vcvt.s32.f32 %v1729
        %v1742 = vcvt.s32.f32 %v1730
        %v1743 = vcvt.s32.f32 %v1731
        %v1744 = vcvt.s32.f32 %v1732
        %v1745 = vcvt.s32.f32 %v1733
        %v1746 = vcvt.s32.f32 %v1734
        %v1747 = vcvt.s32.f32 %v1735
        %v1748 = vpack.c.bf16 %v1739, %v1736
        %v1749 = vpack.c.bf16 %v1740, %v1737
        %v1750 = vpack.c.bf16 %v1741, %v1738
        %v1751 = vpack.c.bf16 %v1745, %v1742
        %v1752 = vpack.c.bf16 %v1746, %v1743
        %v1753 = vpack.c.bf16 %v1747, %v1744
        %v1754 = vld [vmem:[%s4] sm:$0xff]
        %v1755 = vld [vmem:[%s4 + $0x8] sm:$0xff]
        %v1756 = vld [vmem:[%s4 + $0x10] sm:$0xff]
        %v1757 = vld [vmem:[%s4 + $0x18] sm:$0xff]
        %v1758 = vld [vmem:[%s4 + $0x20] sm:$0xff]
        %v1759 = vld [vmem:[%s4 + $0x28] sm:$0xff]
        %v1760 = vld [vmem:[%s4 + $0x30] sm:$0xff]
        %v1761 = vld [vmem:[%s4 + $0x38] sm:$0xff]
        %v1762 = vld [vmem:[%s4 + $0x40] sm:$0xff]
        %v1763 = vld [vmem:[%s4 + $0x48] sm:$0xff]
        %v1764 = vld [vmem:[%s4 + $0x50] sm:$0xff]
        %v1765 = vld [vmem:[%s4 + $0x58] sm:$0xff]
        %v1766 = vld [vmem:[%s4 + $0x60] sm:$0xff]
        %v1767 = vld [vmem:[%s4 + $0x68] sm:$0xff]
        %v1768 = vld [vmem:[%s4 + $0x70] sm:$0xff]
        %v1769 = vld [vmem:[%s4 + $0x78] sm:$0xff]
        %v1770 = vld [vmem:[%s4 + $0x80] sm:$0xff]
        %v1771 = vld [vmem:[%s4 + $0x88] sm:$0xff]
        %v1772 = vld [vmem:[%s4 + $0x90] sm:$0xff]
        %v1773 = vld [vmem:[%s4 + $0x98] sm:$0xff]
        %v1774 = vld [vmem:[%s4 + $0xa0] sm:$0xff]
        %v1775 = vld [vmem:[%s4 + $0xa8] sm:$0xff]
        %v1776 = vld [vmem:[%s4 + $0xb0] sm:$0xff]
        %v1777 = vld [vmem:[%s4 + $0xb8] sm:$0xff]
        %v1778 = vld [vmem:[%s4 + $0xc0] sm:$0xff]
        %v1779 = vld [vmem:[%s4 + $0xc8] sm:$0xff]
        %v1780 = vld [vmem:[%s4 + $0xd0] sm:$0xff]
        %v1781 = vld [vmem:[%s4 + $0xd8] sm:$0xff]
        %v1782 = vld [vmem:[%s4 + $0xe0] sm:$0xff]
        %v1783 = vld [vmem:[%s4 + $0xe8] sm:$0xff]
        %v1784 = vld [vmem:[%s4 + $0xf0] sm:$0xff]
        %v1785 = vld [vmem:[%s4 + $0xf8] sm:$0xff]
        %v1786 = vld [vmem:[%s4 + $0x100] sm:$0xff]
        %v1787 = vld [vmem:[%s4 + $0x108] sm:$0xff]
        %v1788 = vld [vmem:[%s4 + $0x110] sm:$0xff]
        %v1789 = vld [vmem:[%s4 + $0x118] sm:$0xff]
        %v1790 = vld [vmem:[%s4 + $0x120] sm:$0xff]
        %v1791 = vld [vmem:[%s4 + $0x128] sm:$0xff]
        %v1792 = vld [vmem:[%s4 + $0x130] sm:$0xff]
        %v1793 = vld [vmem:[%s4 + $0x138] sm:$0xff]
        %v1794 = vld [vmem:[%s4 + $0x140] sm:$0xff]
        %v1795 = vld [vmem:[%s4 + $0x148] sm:$0xff]
        %v1796 = vld [vmem:[%s4 + $0x150] sm:$0xff]
        %v1797 = vld [vmem:[%s4 + $0x158] sm:$0xff]
        %v1798 = vld [vmem:[%s4 + $0x160] sm:$0xff]
        %v1799 = vld [vmem:[%s4 + $0x168] sm:$0xff]
        %v1800 = vld [vmem:[%s4 + $0x170] sm:$0xff]
        %v1801 = vld [vmem:[%s4 + $0x178] sm:$0xff]
        %v1850 = vunpack.c.l.b16 %v1754
        %v1851 = vunpack.c.h.b16 %v1754
        %v1852 = vunpack.c.l.b16 %v1755
        %v1853 = vunpack.c.h.b16 %v1755
        %v1854 = vunpack.c.l.b16 %v1756
        %v1855 = vunpack.c.h.b16 %v1756
        %v1856 = vunpack.c.l.b16 %v1757
        %v1857 = vunpack.c.h.b16 %v1757
        %v1858 = vunpack.c.l.b16 %v1758
        %v1859 = vunpack.c.h.b16 %v1758
        %v1860 = vunpack.c.l.b16 %v1759
        %v1861 = vunpack.c.h.b16 %v1759
        %v1862 = vunpack.c.l.b16 %v1760
        %v1863 = vunpack.c.h.b16 %v1760
        %v1864 = vunpack.c.l.b16 %v1761
        %v1865 = vunpack.c.h.b16 %v1761
        %v1866 = vunpack.c.l.b16 %v1762
        %v1867 = vunpack.c.h.b16 %v1762
        %v1868 = vunpack.c.l.b16 %v1763
        %v1869 = vunpack.c.h.b16 %v1763
        %v1870 = vunpack.c.l.b16 %v1764
        %v1871 = vunpack.c.h.b16 %v1764
        %v1872 = vunpack.c.l.b16 %v1765
        %v1873 = vunpack.c.h.b16 %v1765
        %v1874 = vunpack.c.l.b16 %v1766
        %v1875 = vunpack.c.h.b16 %v1766
        %v1876 = vunpack.c.l.b16 %v1767
        %v1877 = vunpack.c.h.b16 %v1767
        %v1878 = vunpack.c.l.b16 %v1768
        %v1879 = vunpack.c.h.b16 %v1768
        %v1880 = vunpack.c.l.b16 %v1769
        %v1881 = vunpack.c.h.b16 %v1769
        %v1882 = vunpack.c.l.b16 %v1770
        %v1883 = vunpack.c.h.b16 %v1770
        %v1884 = vunpack.c.l.b16 %v1771
        %v1885 = vunpack.c.h.b16 %v1771
        %v1886 = vunpack.c.l.b16 %v1772
        %v1887 = vunpack.c.h.b16 %v1772
        %v1888 = vunpack.c.l.b16 %v1773
        %v1889 = vunpack.c.h.b16 %v1773
        %v1890 = vunpack.c.l.b16 %v1774
        %v1891 = vunpack.c.h.b16 %v1774
        %v1892 = vunpack.c.l.b16 %v1775
        %v1893 = vunpack.c.h.b16 %v1775
        %v1894 = vunpack.c.l.b16 %v1776
        %v1895 = vunpack.c.h.b16 %v1776
        %v1896 = vunpack.c.l.b16 %v1777
        %v1897 = vunpack.c.h.b16 %v1777
        %v1898 = vunpack.c.l.b16 %v1778
        %v1899 = vunpack.c.h.b16 %v1778
        %v1900 = vunpack.c.l.b16 %v1779
        %v1901 = vunpack.c.h.b16 %v1779
        %v1902 = vunpack.c.l.b16 %v1780
        %v1903 = vunpack.c.h.b16 %v1780
        %v1904 = vunpack.c.l.b16 %v1781
        %v1905 = vunpack.c.h.b16 %v1781
        %v1906 = vunpack.c.l.b16 %v1782
        %v1907 = vunpack.c.h.b16 %v1782
        %v1908 = vunpack.c.l.b16 %v1783
        %v1909 = vunpack.c.h.b16 %v1783
        %v1910 = vunpack.c.l.b16 %v1784
        %v1911 = vunpack.c.h.b16 %v1784
        %v1912 = vunpack.c.l.b16 %v1785
        %v1913 = vunpack.c.h.b16 %v1785
        %v1914 = vunpack.c.l.b16 %v1786
        %v1915 = vunpack.c.h.b16 %v1786
        %v1916 = vunpack.c.l.b16 %v1787
        %v1917 = vunpack.c.h.b16 %v1787
        %v1918 = vunpack.c.l.b16 %v1788
        %v1919 = vunpack.c.h.b16 %v1788
        %v1920 = vunpack.c.l.b16 %v1789
        %v1921 = vunpack.c.h.b16 %v1789
        %v1922 = vunpack.c.l.b16 %v1790
        %v1923 = vunpack.c.h.b16 %v1790
        %v1924 = vunpack.c.l.b16 %v1791
        %v1925 = vunpack.c.h.b16 %v1791
        %v1926 = vunpack.c.l.b16 %v1792
        %v1927 = vunpack.c.h.b16 %v1792
        %v1928 = vunpack.c.l.b16 %v1793
        %v1929 = vunpack.c.h.b16 %v1793
        %v1930 = vunpack.c.l.b16 %v1794
        %v1931 = vunpack.c.h.b16 %v1794
        %v1932 = vunpack.c.l.b16 %v1795
        %v1933 = vunpack.c.h.b16 %v1795
        %v1934 = vunpack.c.l.b16 %v1796
        %v1935 = vunpack.c.h.b16 %v1796
        %v1936 = vunpack.c.l.b16 %v1797
        %v1937 = vunpack.c.h.b16 %v1797
        %v1938 = vunpack.c.l.b16 %v1798
        %v1939 = vunpack.c.h.b16 %v1798
        %v1940 = vunpack.c.l.b16 %v1799
        %v1941 = vunpack.c.h.b16 %v1799
        %v1942 = vunpack.c.l.b16 %v1800
        %v1943 = vunpack.c.h.b16 %v1800
        %v1944 = vunpack.c.l.b16 %v1801
        %v1945 = vunpack.c.h.b16 %v1801
        %v1946 = vpack.c.b16 %v1852, %v1850
        %v1947 = vpack.c.b16 %v1853, %v1851
        %v1948 = vpack.c.b16 %v1856, %v1854
        %v1949 = vpack.c.b16 %v1857, %v1855
        %v1950 = vpack.c.b16 %v1860, %v1858
        %v1951 = vpack.c.b16 %v1861, %v1859
        %v1952 = vpack.c.b16 %v1864, %v1862
        %v1953 = vpack.c.b16 %v1865, %v1863
        %v1954 = vpack.c.b16 %v1868, %v1866
        %v1955 = vpack.c.b16 %v1869, %v1867
        %v1956 = vpack.c.b16 %v1872, %v1870
        %v1957 = vpack.c.b16 %v1873, %v1871
        %v1958 = vpack.c.b16 %v1876, %v1874
        %v1959 = vpack.c.b16 %v1877, %v1875
        %v1960 = vpack.c.b16 %v1880, %v1878
        %v1961 = vpack.c.b16 %v1881, %v1879
        %v1962 = vpack.c.b16 %v1884, %v1882
        %v1963 = vpack.c.b16 %v1885, %v1883
        %v1964 = vpack.c.b16 %v1888, %v1886
        %v1965 = vpack.c.b16 %v1889, %v1887
        %v1966 = vpack.c.b16 %v1892, %v1890
        %v1967 = vpack.c.b16 %v1893, %v1891
        %v1968 = vpack.c.b16 %v1896, %v1894
        %v1969 = vpack.c.b16 %v1897, %v1895
        %v1970 = vpack.c.b16 %v1900, %v1898
        %v1971 = vpack.c.b16 %v1901, %v1899
        %v1972 = vpack.c.b16 %v1904, %v1902
        %v1973 = vpack.c.b16 %v1905, %v1903
        %v1974 = vpack.c.b16 %v1908, %v1906
        %v1975 = vpack.c.b16 %v1909, %v1907
        %v1976 = vpack.c.b16 %v1912, %v1910
        %v1977 = vpack.c.b16 %v1913, %v1911
        %v1978 = vpack.c.b16 %v1916, %v1914
        %v1979 = vpack.c.b16 %v1917, %v1915
        %v1980 = vpack.c.b16 %v1920, %v1918
        %v1981 = vpack.c.b16 %v1921, %v1919
        %v1982 = vpack.c.b16 %v1924, %v1922
        %v1983 = vpack.c.b16 %v1925, %v1923
        %v1984 = vpack.c.b16 %v1928, %v1926
        %v1985 = vpack.c.b16 %v1929, %v1927
        %v1986 = vpack.c.b16 %v1932, %v1930
        %v1987 = vpack.c.b16 %v1933, %v1931
        %v1988 = vpack.c.b16 %v1936, %v1934
        %v1989 = vpack.c.b16 %v1937, %v1935
        %v1990 = vpack.c.b16 %v1940, %v1938
        %v1991 = vpack.c.b16 %v1941, %v1939
        %v1992 = vpack.c.b16 %v1944, %v1942
        %v1993 = vpack.c.b16 %v1945, %v1943
        %2042 = vmatpush.bf16.msra.mxu0 %v1960
        %2043 = vmatpush.bf16.msra.mxu0 %v1958
        %2044 = vmatpush.bf16.msra.mxu0 %v1956
        %2045 = vmatpush.bf16.msra.mxu0 %v1954
        %2046 = vmatpush.bf16.msra.mxu0 %v1952
        %2047 = vmatpush.bf16.msra.mxu0 %v1950
        %2048 = vmatpush.bf16.msra.mxu0 %v1948
        %2049 = vmatpush.bf16.msra.mxu0 %v1946
        %2050 = vmatmul.bf16.gmra.mxu0 %v1748
        %v2051 = vpop.f32.mrf.mxu0
        %v2052 = vadd.f32 0.0, %v2051
        %v2053 = vpop.f32.mrf.mxu0
        %v2054 = vadd.f32 0.0, %v2053
        %2055 = vmatmul.bf16.gmra.mxu0 %v1751
        %v2056 = vpop.f32.mrf.mxu0
        %v2057 = vadd.f32 0.0, %v2056
        %v2058 = vpop.f32.mrf.mxu0
        %v2059 = vadd.f32 0.0, %v2058
        %2060 = vdwg.mxu0
        %2061 = vmatpush.bf16.msra.mxu0 %v1976
        %2062 = vmatpush.bf16.msra.mxu0 %v1974
        %2063 = vmatpush.bf16.msra.mxu0 %v1972
        %2064 = vmatpush.bf16.msra.mxu0 %v1970
        %2065 = vmatpush.bf16.msra.mxu0 %v1968
        %2066 = vmatpush.bf16.msra.mxu0 %v1966
        %2067 = vmatpush.bf16.msra.mxu0 %v1964
        %2068 = vmatpush.bf16.msra.mxu0 %v1962
        %2069 = vmatmul.bf16.gmra.mxu0 %v1749
        %v2070 = vpop.f32.mrf.mxu0
        %v2071 = vadd.f32 %v2052, %v2070
        %v2072 = vpop.f32.mrf.mxu0
        %v2073 = vadd.f32 %v2054, %v2072
        %2074 = vmatmul.bf16.gmra.mxu0 %v1752
        %v2075 = vpop.f32.mrf.mxu0
        %v2076 = vadd.f32 %v2057, %v2075
        %v2077 = vpop.f32.mrf.mxu0
        %v2078 = vadd.f32 %v2059, %v2077
        %2079 = vdwg.mxu0
        %2080 = vmatpush.bf16.msra.mxu0 %v1992
        %2081 = vmatpush.bf16.msra.mxu0 %v1990
        %2082 = vmatpush.bf16.msra.mxu0 %v1988
        %2083 = vmatpush.bf16.msra.mxu0 %v1986
        %2084 = vmatpush.bf16.msra.mxu0 %v1984
        %2085 = vmatpush.bf16.msra.mxu0 %v1982
        %2086 = vmatpush.bf16.msra.mxu0 %v1980
        %2087 = vmatpush.bf16.msra.mxu0 %v1978
        %2088 = vmatmul.bf16.gmra.mxu0 %v1750
        %v2089 = vpop.f32.mrf.mxu0
        %v2090 = vadd.f32 %v2071, %v2089
        %v2091 = vpop.f32.mrf.mxu0
        %v2092 = vadd.f32 %v2073, %v2091
        %2093 = vmatmul.bf16.gmra.mxu0 %v1753
        %v2094 = vpop.f32.mrf.mxu0
        %v2095 = vadd.f32 %v2076, %v2094
        %v2096 = vpop.f32.mrf.mxu0
        %v2097 = vadd.f32 %v2078, %v2096
        %2098 = vdwg.mxu0
        %2099 = vmatpush.bf16.msra.mxu0 %v1961
        %2100 = vmatpush.bf16.msra.mxu0 %v1959
        %2101 = vmatpush.bf16.msra.mxu0 %v1957
        %2102 = vmatpush.bf16.msra.mxu0 %v1955
        %2103 = vmatpush.bf16.msra.mxu0 %v1953
        %2104 = vmatpush.bf16.msra.mxu0 %v1951
        %2105 = vmatpush.bf16.msra.mxu0 %v1949
        %2106 = vmatpush.bf16.msra.mxu0 %v1947
        %2107 = vmatmul.bf16.gmra.mxu0 %v1748
        %v2108 = vpop.f32.mrf.mxu0
        %v2109 = vadd.f32 0.0, %v2108
        %v2110 = vpop.f32.mrf.mxu0
        %v2111 = vadd.f32 0.0, %v2110
        %2112 = vmatmul.bf16.gmra.mxu0 %v1751
        %v2113 = vpop.f32.mrf.mxu0
        %v2114 = vadd.f32 0.0, %v2113
        %v2115 = vpop.f32.mrf.mxu0
        %v2116 = vadd.f32 0.0, %v2115
        %2117 = vdwg.mxu0
        %2118 = vmatpush.bf16.msra.mxu0 %v1977
        %2119 = vmatpush.bf16.msra.mxu0 %v1975
        %2120 = vmatpush.bf16.msra.mxu0 %v1973
        %2121 = vmatpush.bf16.msra.mxu0 %v1971
        %2122 = vmatpush.bf16.msra.mxu0 %v1969
        %2123 = vmatpush.bf16.msra.mxu0 %v1967
        %2124 = vmatpush.bf16.msra.mxu0 %v1965
        %2125 = vmatpush.bf16.msra.mxu0 %v1963
        %2126 = vmatmul.bf16.gmra.mxu0 %v1749
        %v2127 = vpop.f32.mrf.mxu0
        %v2128 = vadd.f32 %v2109, %v2127
        %v2129 = vpop.f32.mrf.mxu0
        %v2130 = vadd.f32 %v2111, %v2129
        %2131 = vmatmul.bf16.gmra.mxu0 %v1752
        %v2132 = vpop.f32.mrf.mxu0
        %v2133 = vadd.f32 %v2114, %v2132
        %v2134 = vpop.f32.mrf.mxu0
        %v2135 = vadd.f32 %v2116, %v2134
        %2136 = vdwg.mxu0
        %2137 = vmatpush.bf16.msra.mxu0 %v1993
        %2138 = vmatpush.bf16.msra.mxu0 %v1991
        %2139 = vmatpush.bf16.msra.mxu0 %v1989
        %2140 = vmatpush.bf16.msra.mxu0 %v1987
        %2141 = vmatpush.bf16.msra.mxu0 %v1985
        %2142 = vmatpush.bf16.msra.mxu0 %v1983
        %2143 = vmatpush.bf16.msra.mxu0 %v1981
        %2144 = vmatpush.bf16.msra.mxu0 %v1979
        %2145 = vmatmul.bf16.gmra.mxu0 %v1750
        %v2146 = vpop.f32.mrf.mxu0
        %v2147 = vadd.f32 %v2128, %v2146
        %v2148 = vpop.f32.mrf.mxu0
        %v2149 = vadd.f32 %v2130, %v2148
        %2150 = vmatmul.bf16.gmra.mxu0 %v1753
        %v2151 = vpop.f32.mrf.mxu0
        %v2152 = vadd.f32 %v2133, %v2151
        %v2153 = vpop.f32.mrf.mxu0
        %v2154 = vadd.f32 %v2135, %v2153
        %2155 = vdwg.mxu0
        %vm2156 = vcmp.gt.f32.partialorder %v2090, 0.5
        %vm2157 = vcmp.gt.f32.partialorder %v2147, 0.5
        %vm2158 = vcmp.gt.f32.partialorder %v2092, 0.5
        %vm2159 = vcmp.gt.f32.partialorder %v2149, 0.5
        %vm2160 = vcmp.gt.f32.partialorder %v2095, 0.5
        %vm2161 = vcmp.gt.f32.partialorder %v2152, 0.5
        %vm2162 = vcmp.gt.f32.partialorder %v2097, 0.5
        %vm2163 = vcmp.gt.f32.partialorder %v2154, 0.5
        %v2164 = vsel %vm2156, 1, 0
        %v2165 = vsel %vm2157, 1, 0
        %v2166 = vsel %vm2158, 1, 0
        %v2167 = vsel %vm2159, 1, 0
        %v2168 = vsel %vm2160, 1, 0
        %v2169 = vsel %vm2161, 1, 0
        %v2170 = vsel %vm2162, 1, 0
        %v2171 = vsel %vm2163, 1, 0
        %v2172 = vcvt.s32.f32 %v2164
        %v2173 = vcvt.s32.f32 %v2165
        %v2174 = vcvt.s32.f32 %v2166
        %v2175 = vcvt.s32.f32 %v2167
        %v2176 = vcvt.s32.f32 %v2168
        %v2177 = vcvt.s32.f32 %v2169
        %v2178 = vcvt.s32.f32 %v2170
        %v2179 = vcvt.s32.f32 %v2171
        %v2180 = vpack.c.bf16 %v2173, %v2172
        %v2181 = vpack.c.bf16 %v2175, %v2174
        %v2182 = vpack.c.bf16 %v2177, %v2176
        %v2183 = vpack.c.bf16 %v2179, %v2178
        %2184 = vst [vmem:[#allocation3] sm:$0xf] %v2180
        %2185 = vst [vmem:[#allocation3 + $0x4] sm:$0xf] %v2181
        %2186 = vst [vmem:[#allocation3 + $0x8] sm:$0xf] %v2182
        %2187 = vst [vmem:[#allocation3 + $0xc] sm:$0xf] %v2183
        %2192 = vrot.lane.b32.xlu0 %v2180, 127
        %v2193 = vpop.permute.xlu0 %2192
        %2194 = vrot.lane.b32.xlu0 %v2181, 127
        %v2195 = vpop.permute.xlu0 %2194
        %2196 = vrot.lane.b32.xlu0 %v2182, 127
        %v2197 = vpop.permute.xlu0 %2196
        %2198 = vrot.lane.b32.xlu0 %v2183, 127
        %v2199 = vpop.permute.xlu0 %2198
        %v2200 = vrot.slane %v2193, 4
        %v2201 = vrot.slane %v2195, 4
        %v2202 = vrot.slane %v2197, 4
        %v2203 = vrot.slane %v2199, 4
        %v2204 = vsel %vm295, %v2193, %v2200
        %v2205 = vsel %vm295, %v2195, %v2201
        %v2206 = vsel %vm295, %v2197, %v2202
        %v2207 = vsel %vm295, %v2199, %v2203
        %2212 = vst [vmem:[#allocation3 + $0x10] sm:$0xf] %v2204
        %2213 = vst [vmem:[#allocation3 + $0x14] sm:$0xf] %v2205
        %2214 = vst [vmem:[#allocation3 + $0x18] sm:$0xf] %v2206
        %2215 = vst [vmem:[#allocation3 + $0x1c] sm:$0xf] %v2207
        %2216 = vrot.lane.b32.xlu0 %v2180, 117
        %v2217 = vpop.permute.xlu0 %2216
        %2218 = vrot.lane.b32.xlu0 %v2181, 117
        %v2219 = vpop.permute.xlu0 %2218
        %2220 = vrot.lane.b32.xlu0 %v2182, 117
        %v2221 = vpop.permute.xlu0 %2220
        %2222 = vrot.lane.b32.xlu0 %v2183, 117
        %v2223 = vpop.permute.xlu0 %2222
        %v2224 = vrot.slane %v2217, 4
        %v2225 = vrot.slane %v2219, 4
        %v2226 = vrot.slane %v2221, 4
        %v2227 = vrot.slane %v2223, 4
        %vm2228 = vcmask 957440
        %v2229 = vsel %vm2228, %v2217, %v2224
        %v2230 = vsel %vm2228, %v2219, %v2225
        %v2231 = vsel %vm2228, %v2221, %v2226
        %v2232 = vsel %vm2228, %v2223, %v2227
        %2237 = vst [vmem:[#allocation3 + $0x20] sm:$0xf] %v2229
        %2238 = vst [vmem:[#allocation3 + $0x24] sm:$0xf] %v2230
        %2239 = vst [vmem:[#allocation3 + $0x28] sm:$0xf] %v2231
        %2240 = vst [vmem:[#allocation3 + $0x2c] sm:$0xf] %v2232
        %2241 = vrot.lane.b32.xlu0 %v2180, 116
        %v2242 = vpop.permute.xlu0 %2241
        %2243 = vrot.lane.b32.xlu0 %v2181, 116
        %v2244 = vpop.permute.xlu0 %2243
        %2245 = vrot.lane.b32.xlu0 %v2182, 116
        %v2246 = vpop.permute.xlu0 %2245
        %2247 = vrot.lane.b32.xlu0 %v2183, 116
        %v2248 = vpop.permute.xlu0 %2247
        %v2249 = vrot.slane %v2242, 4
        %v2250 = vrot.slane %v2244, 4
        %v2251 = vrot.slane %v2246, 4
        %v2252 = vrot.slane %v2248, 4
        %vm2253 = vcmask 949248
        %v2254 = vsel %vm2253, %v2242, %v2249
        %v2255 = vsel %vm2253, %v2244, %v2250
        %v2256 = vsel %vm2253, %v2246, %v2251
        %v2257 = vsel %vm2253, %v2248, %v2252
        %2262 = vst [vmem:[#allocation3 + $0x30] sm:$0xf] %v2254
        %2263 = vst [vmem:[#allocation3 + $0x34] sm:$0xf] %v2255
        %2264 = vst [vmem:[#allocation3 + $0x38] sm:$0xf] %v2256
        %2265 = vst [vmem:[#allocation3 + $0x3c] sm:$0xf] %v2257
        %v2266 = vld [vmem:[%s3] sm:$0xf]
        %v2267 = vld [vmem:[%s3 + $0x4] sm:$0xf]
        %v2268 = vld [vmem:[%s3 + $0x8] sm:$0xf]
        %v2269 = vld [vmem:[%s3 + $0xc] sm:$0xf]
        %v2270 = vld [vmem:[%s3 + $0x10] sm:$0xf]
        %v2271 = vld [vmem:[%s3 + $0x14] sm:$0xf]
        %v2272 = vld [vmem:[%s3 + $0x18] sm:$0xf]
        %v2273 = vld [vmem:[%s3 + $0x1c] sm:$0xf]
        %v2274 = vld [vmem:[%s3 + $0x20] sm:$0xf]
        %v2275 = vld [vmem:[%s3 + $0x24] sm:$0xf]
        %v2276 = vld [vmem:[%s3 + $0x28] sm:$0xf]
        %v2277 = vld [vmem:[%s3 + $0x2c] sm:$0xf]
        %v2278 = vld [vmem:[%s3 + $0x30] sm:$0xf]
        %v2279 = vld [vmem:[%s3 + $0x34] sm:$0xf]
        %v2280 = vld [vmem:[%s3 + $0x38] sm:$0xf]
        %v2281 = vld [vmem:[%s3 + $0x3c] sm:$0xf]
        %v2282 = vld [vmem:[%s3 + $0x40] sm:$0xf]
        %v2283 = vld [vmem:[%s3 + $0x44] sm:$0xf]
        %v2284 = vld [vmem:[%s3 + $0x48] sm:$0x7]
        %v2285 = vld [vmem:[#allocation3] sm:$0xf]
        %v2286 = vld [vmem:[#allocation3 + $0x4] sm:$0xf]
        %v2287 = vld [vmem:[#allocation3 + $0x8] sm:$0xf]
        %v2288 = vld [vmem:[#allocation3 + $0xc] sm:$0xf]
        %v2289 = vld [vmem:[#allocation3 + $0x10] sm:$0xf]
        %v2290 = vld [vmem:[#allocation3 + $0x14] sm:$0xf]
        %v2291 = vld [vmem:[#allocation3 + $0x18] sm:$0xf]
        %v2292 = vld [vmem:[#allocation3 + $0x1c] sm:$0xf]
        %v2293 = vld [vmem:[#allocation3 + $0x20] sm:$0xf]
        %v2294 = vld [vmem:[#allocation3 + $0x24] sm:$0xf]
        %v2295 = vld [vmem:[#allocation3 + $0x28] sm:$0xf]
        %v2296 = vld [vmem:[#allocation3 + $0x2c] sm:$0xf]
        %v2297 = vld [vmem:[#allocation3 + $0x30] sm:$0xf]
        %v2298 = vld [vmem:[#allocation3 + $0x34] sm:$0xf]
        %v2299 = vld [vmem:[#allocation3 + $0x38] sm:$0xf]
        %v2300 = vld [vmem:[#allocation3 + $0x3c] sm:$0xf]
        %v2320 = vunpack.c.l.b16 %v2266
        %v2321 = vunpack.c.l.b16 %v2267
        %v2322 = vunpack.c.l.b16 %v2268
        %v2323 = vunpack.c.l.b16 %v2269
        %v2324 = vunpack.c.l.b16 %v2270
        %v2325 = vunpack.c.l.b16 %v2271
        %v2326 = vunpack.c.l.b16 %v2272
        %v2327 = vunpack.c.l.b16 %v2273
        %v2328 = vunpack.c.l.b16 %v2274
        %v2329 = vunpack.c.l.b16 %v2275
        %v2330 = vunpack.c.l.b16 %v2276
        %v2331 = vunpack.c.l.b16 %v2277
        %v2332 = vunpack.c.l.b16 %v2278
        %v2333 = vunpack.c.l.b16 %v2279
        %v2334 = vunpack.c.l.b16 %v2280
        %v2335 = vunpack.c.l.b16 %v2281
        %v2336 = vunpack.c.l.b16 %v2282
        %v2337 = vunpack.c.l.b16 %v2283
        %v2338 = vunpack.c.l.b16 %v2284
        %v2339 = vpack.c.b16 %v2321, %v2320
        %v2340 = vpack.c.b16 %v2323, %v2322
        %v2341 = vpack.c.b16 %v2325, %v2324
        %v2342 = vpack.c.b16 %v2327, %v2326
        %v2343 = vpack.c.b16 %v2329, %v2328
        %v2344 = vpack.c.b16 %v2331, %v2330
        %v2345 = vpack.c.b16 %v2333, %v2332
        %v2346 = vpack.c.b16 %v2335, %v2334
        %v2347 = vpack.c.b16 %v2337, %v2336
        %v2348 = vpack.c.b16 %v2338, %v2338
        %v2375 = vunpack.c.l.b16 %v2285
        %v2376 = vunpack.c.l.b16 %v2286
        %v2377 = vunpack.c.l.b16 %v2287
        %v2378 = vunpack.c.l.b16 %v2288
        %v2379 = vunpack.c.l.b16 %v2289
        %v2380 = vunpack.c.l.b16 %v2290
        %v2381 = vunpack.c.l.b16 %v2291
        %v2382 = vunpack.c.l.b16 %v2292
        %v2383 = vunpack.c.l.b16 %v2293
        %v2384 = vunpack.c.l.b16 %v2294
        %v2385 = vunpack.c.l.b16 %v2295
        %v2386 = vunpack.c.l.b16 %v2296
        %v2387 = vunpack.c.l.b16 %v2297
        %v2388 = vunpack.c.l.b16 %v2298
        %v2389 = vunpack.c.l.b16 %v2299
        %v2390 = vunpack.c.l.b16 %v2300
        %v2391 = vpack.c.b16 %v2376, %v2375
        %v2392 = vpack.c.b16 %v2378, %v2377
        %v2393 = vpack.c.b16 %v2380, %v2379
        %v2394 = vpack.c.b16 %v2382, %v2381
        %v2395 = vpack.c.b16 %v2384, %v2383
        %v2396 = vpack.c.b16 %v2386, %v2385
        %v2397 = vpack.c.b16 %v2388, %v2387
        %v2398 = vpack.c.b16 %v2390, %v2389
        %2407 = vmatpush.bf16.msra.mxu0 %v2398
        %2408 = vmatpush.bf16.msra.mxu0 %v2397
        %2409 = vmatpush.bf16.msra.mxu0 %v2396
        %2410 = vmatpush.bf16.msra.mxu0 %v2395
        %2411 = vmatpush.bf16.msra.mxu0 %v2394
        %2412 = vmatpush.bf16.msra.mxu0 %v2393
        %2413 = vmatpush.bf16.msra.mxu0 %v2392
        %2414 = vmatpush.bf16.msra.mxu0 %v2391
        %2415 = vmatmul.bf16.gmra.mxu0 %v2339
        %v2416 = vpop.f32.mrf.mxu0
        %v2417 = vadd.f32 0.0, %v2416
        %v2418 = vpop.f32.mrf.mxu0
        %v2419 = vadd.f32 0.0, %v2418
        %2420 = vmatmul.bf16.gmra.mxu0 %v2340
        %v2421 = vpop.f32.mrf.mxu0
        %v2422 = vadd.f32 0.0, %v2421
        %v2423 = vpop.f32.mrf.mxu0
        %v2424 = vadd.f32 0.0, %v2423
        %2425 = vmatmul.bf16.gmra.mxu0 %v2341
        %v2426 = vpop.f32.mrf.mxu0
        %v2427 = vadd.f32 0.0, %v2426
        %v2428 = vpop.f32.mrf.mxu0
        %v2429 = vadd.f32 0.0, %v2428
        %2430 = vmatmul.bf16.gmra.mxu0 %v2342
        %v2431 = vpop.f32.mrf.mxu0
        %v2432 = vadd.f32 0.0, %v2431
        %v2433 = vpop.f32.mrf.mxu0
        %v2434 = vadd.f32 0.0, %v2433
        %2435 = vmatmul.bf16.gmra.mxu0 %v2343
        %v2436 = vpop.f32.mrf.mxu0
        %v2437 = vadd.f32 0.0, %v2436
        %v2438 = vpop.f32.mrf.mxu0
        %v2439 = vadd.f32 0.0, %v2438
        %2440 = vmatmul.bf16.gmra.mxu0 %v2344
        %v2441 = vpop.f32.mrf.mxu0
        %v2442 = vadd.f32 0.0, %v2441
        %v2443 = vpop.f32.mrf.mxu0
        %v2444 = vadd.f32 0.0, %v2443
        %2445 = vmatmul.bf16.gmra.mxu0 %v2345
        %v2446 = vpop.f32.mrf.mxu0
        %v2447 = vadd.f32 0.0, %v2446
        %v2448 = vpop.f32.mrf.mxu0
        %v2449 = vadd.f32 0.0, %v2448
        %2450 = vmatmul.bf16.gmra.mxu0 %v2346
        %v2451 = vpop.f32.mrf.mxu0
        %v2452 = vadd.f32 0.0, %v2451
        %v2453 = vpop.f32.mrf.mxu0
        %v2454 = vadd.f32 0.0, %v2453
        %2455 = vmatmul.bf16.gmra.mxu0 %v2347
        %v2456 = vpop.f32.mrf.mxu0
        %v2457 = vadd.f32 0.0, %v2456
        %v2458 = vpop.f32.mrf.mxu0
        %v2459 = vadd.f32 0.0, %v2458
        %2460 = vmatmul.bf16.gmra.mxu0 %v2348
        %v2461 = vpop.f32.mrf.mxu0
        %v2462 = vadd.f32 0.0, %v2461
        %v2463 = vpop.f32.mrf.mxu0
        %2464 = vdwg.mxu0
        %v2465 = vstv %s268
        %vm2466 = vcmp.gt.f32.partialorder %v2417, %v2465
        %vm2467 = vcmp.gt.f32.partialorder %v2419, %v2465
        %vm2468 = vcmp.gt.f32.partialorder %v2422, %v2465
        %vm2469 = vcmp.gt.f32.partialorder %v2424, %v2465
        %vm2470 = vcmp.gt.f32.partialorder %v2427, %v2465
        %vm2471 = vcmp.gt.f32.partialorder %v2429, %v2465
        %vm2472 = vcmp.gt.f32.partialorder %v2432, %v2465
        %vm2473 = vcmp.gt.f32.partialorder %v2434, %v2465
        %vm2474 = vcmp.gt.f32.partialorder %v2437, %v2465
        %vm2475 = vcmp.gt.f32.partialorder %v2439, %v2465
        %vm2476 = vcmp.gt.f32.partialorder %v2442, %v2465
        %vm2477 = vcmp.gt.f32.partialorder %v2444, %v2465
        %vm2478 = vcmp.gt.f32.partialorder %v2447, %v2465
        %vm2479 = vcmp.gt.f32.partialorder %v2449, %v2465
        %vm2480 = vcmp.gt.f32.partialorder %v2452, %v2465
        %vm2481 = vcmp.gt.f32.partialorder %v2454, %v2465
        %vm2482 = vcmp.gt.f32.partialorder %v2457, %v2465
        %vm2483 = vcmp.gt.f32.partialorder %v2459, %v2465
        %vm2484 = vcmp.gt.f32.partialorder %v2462, %v2465
        %v2485 = vsel %vm2466, 1, 0
        %v2486 = vsel %vm2467, 1, 0
        %v2487 = vsel %vm2468, 1, 0
        %v2488 = vsel %vm2469, 1, 0
        %v2489 = vsel %vm2470, 1, 0
        %v2490 = vsel %vm2471, 1, 0
        %v2491 = vsel %vm2472, 1, 0
        %v2492 = vsel %vm2473, 1, 0
        %v2493 = vsel %vm2474, 1, 0
        %v2494 = vsel %vm2475, 1, 0
        %v2495 = vsel %vm2476, 1, 0
        %v2496 = vsel %vm2477, 1, 0
        %v2497 = vsel %vm2478, 1, 0
        %v2498 = vsel %vm2479, 1, 0
        %v2499 = vsel %vm2480, 1, 0
        %v2500 = vsel %vm2481, 1, 0
        %v2501 = vsel %vm2482, 1, 0
        %v2502 = vsel %vm2483, 1, 0
        %v2503 = vsel %vm2484, 1, 0
        %v2504 = vcvt.s32.f32 %v2485
        %v2505 = vcvt.s32.f32 %v2486
        %v2506 = vcvt.s32.f32 %v2487
        %v2507 = vcvt.s32.f32 %v2488
        %v2508 = vcvt.s32.f32 %v2489
        %v2509 = vcvt.s32.f32 %v2490
        %v2510 = vcvt.s32.f32 %v2491
        %v2511 = vcvt.s32.f32 %v2492
        %v2512 = vcvt.s32.f32 %v2493
        %v2513 = vcvt.s32.f32 %v2494
        %v2514 = vcvt.s32.f32 %v2495
        %v2515 = vcvt.s32.f32 %v2496
        %v2516 = vcvt.s32.f32 %v2497
        %v2517 = vcvt.s32.f32 %v2498
        %v2518 = vcvt.s32.f32 %v2499
        %v2519 = vcvt.s32.f32 %v2500
        %v2520 = vcvt.s32.f32 %v2501
        %v2521 = vcvt.s32.f32 %v2502
        %v2522 = vcvt.s32.f32 %v2503
        %v2523 = vpack.c.bf16 %v2505, %v2504
        %v2524 = vpack.c.bf16 %v2507, %v2506
        %v2525 = vpack.c.bf16 %v2509, %v2508
        %v2526 = vpack.c.bf16 %v2511, %v2510
        %v2527 = vpack.c.bf16 %v2513, %v2512
        %v2528 = vpack.c.bf16 %v2515, %v2514
        %v2529 = vpack.c.bf16 %v2517, %v2516
        %v2530 = vpack.c.bf16 %v2519, %v2518
        %v2531 = vpack.c.bf16 %v2521, %v2520
        %v2532 = vpack.c.bf16 %v2522, %v2522
        %v2533 = vld [vmem:[%s5] sm:$0xf]
        %v2534 = vld [vmem:[%s5 + $0x4] sm:$0xf]
        %v2535 = vld [vmem:[%s5 + $0x8] sm:$0xf]
        %v2536 = vld [vmem:[%s5 + $0xc] sm:$0xf]
        %v2537 = vld [vmem:[%s5 + $0x10] sm:$0xf]
        %v2538 = vld [vmem:[%s5 + $0x14] sm:$0xf]
        %v2539 = vld [vmem:[%s5 + $0x18] sm:$0xf]
        %v2540 = vld [vmem:[%s5 + $0x1c] sm:$0xf]
        %v2541 = vld [vmem:[%s5 + $0x20] sm:$0xf]
        %v2542 = vld [vmem:[%s5 + $0x24] sm:$0xf]
        %v2543 = vld [vmem:[%s5 + $0x28] sm:$0xf]
        %v2544 = vld [vmem:[%s5 + $0x2c] sm:$0xf]
        %v2545 = vld [vmem:[%s5 + $0x30] sm:$0xf]
        %v2546 = vld [vmem:[%s5 + $0x34] sm:$0xf]
        %v2547 = vld [vmem:[%s5 + $0x38] sm:$0xf]
        %v2548 = vld [vmem:[%s5 + $0x3c] sm:$0xf]
        %v2565 = vunpack.c.l.b16 %v2533
        %v2566 = vunpack.c.l.b16 %v2534
        %v2567 = vunpack.c.l.b16 %v2535
        %v2568 = vunpack.c.l.b16 %v2536
        %v2569 = vunpack.c.l.b16 %v2537
        %v2570 = vunpack.c.l.b16 %v2538
        %v2571 = vunpack.c.l.b16 %v2539
        %v2572 = vunpack.c.l.b16 %v2540
        %v2573 = vunpack.c.l.b16 %v2541
        %v2574 = vunpack.c.l.b16 %v2542
        %v2575 = vunpack.c.l.b16 %v2543
        %v2576 = vunpack.c.l.b16 %v2544
        %v2577 = vunpack.c.l.b16 %v2545
        %v2578 = vunpack.c.l.b16 %v2546
        %v2579 = vunpack.c.l.b16 %v2547
        %v2580 = vunpack.c.l.b16 %v2548
        %v2581 = vpack.c.b16 %v2566, %v2565
        %v2582 = vpack.c.b16 %v2568, %v2567
        %v2583 = vpack.c.b16 %v2570, %v2569
        %v2584 = vpack.c.b16 %v2572, %v2571
        %v2585 = vpack.c.b16 %v2574, %v2573
        %v2586 = vpack.c.b16 %v2576, %v2575
        %v2587 = vpack.c.b16 %v2578, %v2577
        %v2588 = vpack.c.b16 %v2580, %v2579
        %2597 = vmatpush.bf16.msra.mxu0 %v2588
        %2598 = vmatpush.bf16.msra.mxu0 %v2587
        %2599 = vmatpush.bf16.msra.mxu0 %v2586
        %2600 = vmatpush.bf16.msra.mxu0 %v2585
        %2601 = vmatpush.bf16.msra.mxu0 %v2584
        %2602 = vmatpush.bf16.msra.mxu0 %v2583
        %2603 = vmatpush.bf16.msra.mxu0 %v2582
        %2604 = vmatpush.bf16.msra.mxu0 %v2581
        %2605 = vmatmul.bf16.gmra.mxu0 %v2523
        %v2606 = vpop.f32.mrf.mxu0
        %v2607 = vadd.f32 0.0, %v2606
        %v2608 = vpop.f32.mrf.mxu0
        %v2609 = vadd.f32 0.0, %v2608
        %2610 = vmatmul.bf16.gmra.mxu0 %v2524
        %v2611 = vpop.f32.mrf.mxu0
        %v2612 = vadd.f32 0.0, %v2611
        %v2613 = vpop.f32.mrf.mxu0
        %v2614 = vadd.f32 0.0, %v2613
        %2615 = vmatmul.bf16.gmra.mxu0 %v2525
        %v2616 = vpop.f32.mrf.mxu0
        %v2617 = vadd.f32 0.0, %v2616
        %v2618 = vpop.f32.mrf.mxu0
        %v2619 = vadd.f32 0.0, %v2618
        %2620 = vmatmul.bf16.gmra.mxu0 %v2526
        %v2621 = vpop.f32.mrf.mxu0
        %v2622 = vadd.f32 0.0, %v2621
        %v2623 = vpop.f32.mrf.mxu0
        %v2624 = vadd.f32 0.0, %v2623
        %2625 = vmatmul.bf16.gmra.mxu0 %v2527
        %v2626 = vpop.f32.mrf.mxu0
        %v2627 = vadd.f32 0.0, %v2626
        %v2628 = vpop.f32.mrf.mxu0
        %v2629 = vadd.f32 0.0, %v2628
        %2630 = vmatmul.bf16.gmra.mxu0 %v2528
        %v2631 = vpop.f32.mrf.mxu0
        %v2632 = vadd.f32 0.0, %v2631
        %v2633 = vpop.f32.mrf.mxu0
        %v2634 = vadd.f32 0.0, %v2633
        %2635 = vmatmul.bf16.gmra.mxu0 %v2529
        %v2636 = vpop.f32.mrf.mxu0
        %v2637 = vadd.f32 0.0, %v2636
        %v2638 = vpop.f32.mrf.mxu0
        %v2639 = vadd.f32 0.0, %v2638
        %2640 = vmatmul.bf16.gmra.mxu0 %v2530
        %v2641 = vpop.f32.mrf.mxu0
        %v2642 = vadd.f32 0.0, %v2641
        %v2643 = vpop.f32.mrf.mxu0
        %v2644 = vadd.f32 0.0, %v2643
        %2645 = vmatmul.bf16.gmra.mxu0 %v2531
        %v2646 = vpop.f32.mrf.mxu0
        %v2647 = vadd.f32 0.0, %v2646
        %v2648 = vpop.f32.mrf.mxu0
        %v2649 = vadd.f32 0.0, %v2648
        %2650 = vmatmul.bf16.gmra.mxu0 %v2532
        %v2651 = vpop.f32.mrf.mxu0
        %v2652 = vadd.f32 0.0, %v2651
        %v2653 = vpop.f32.mrf.mxu0
        %2654 = vdwg.mxu0
        %vm2655 = vcmp.gt.f32.partialorder %v2607, 0.5
        %vm2656 = vcmp.gt.f32.partialorder %v2609, 0.5
        %vm2657 = vcmp.gt.f32.partialorder %v2612, 0.5
        %vm2658 = vcmp.gt.f32.partialorder %v2614, 0.5
        %vm2659 = vcmp.gt.f32.partialorder %v2617, 0.5
        %vm2660 = vcmp.gt.f32.partialorder %v2619, 0.5
        %vm2661 = vcmp.gt.f32.partialorder %v2622, 0.5
        %vm2662 = vcmp.gt.f32.partialorder %v2624, 0.5
        %vm2663 = vcmp.gt.f32.partialorder %v2627, 0.5
        %vm2664 = vcmp.gt.f32.partialorder %v2629, 0.5
        %vm2665 = vcmp.gt.f32.partialorder %v2632, 0.5
        %vm2666 = vcmp.gt.f32.partialorder %v2634, 0.5
        %vm2667 = vcmp.gt.f32.partialorder %v2637, 0.5
        %vm2668 = vcmp.gt.f32.partialorder %v2639, 0.5
        %vm2669 = vcmp.gt.f32.partialorder %v2642, 0.5
        %vm2670 = vcmp.gt.f32.partialorder %v2644, 0.5
        %vm2671 = vcmp.gt.f32.partialorder %v2647, 0.5
        %vm2672 = vcmp.gt.f32.partialorder %v2649, 0.5
        %vm2673 = vcmp.gt.f32.partialorder %v2652, 0.5
        %v2674 = vsel %vm2655, 1, 0
        %v2675 = vsel %vm2656, 1, 0
        %v2676 = vsel %vm2657, 1, 0
        %v2677 = vsel %vm2658, 1, 0
        %v2678 = vsel %vm2659, 1, 0
        %v2679 = vsel %vm2660, 1, 0
        %v2680 = vsel %vm2661, 1, 0
        %v2681 = vsel %vm2662, 1, 0
        %v2682 = vsel %vm2663, 1, 0
        %v2683 = vsel %vm2664, 1, 0
        %v2684 = vsel %vm2665, 1, 0
        %v2685 = vsel %vm2666, 1, 0
        %v2686 = vsel %vm2667, 1, 0
        %v2687 = vsel %vm2668, 1, 0
        %v2688 = vsel %vm2669, 1, 0
        %v2689 = vsel %vm2670, 1, 0
        %v2690 = vsel %vm2671, 1, 0
        %v2691 = vsel %vm2672, 1, 0
        %v2692 = vsel %vm2673, 1, 0
        %v2693 = vcvt.s32.f32 %v2674
        %v2694 = vcvt.s32.f32 %v2675
        %v2695 = vcvt.s32.f32 %v2676
        %v2696 = vcvt.s32.f32 %v2677
        %v2697 = vcvt.s32.f32 %v2678
        %v2698 = vcvt.s32.f32 %v2679
        %v2699 = vcvt.s32.f32 %v2680
        %v2700 = vcvt.s32.f32 %v2681
        %v2701 = vcvt.s32.f32 %v2682
        %v2702 = vcvt.s32.f32 %v2683
        %v2703 = vcvt.s32.f32 %v2684
        %v2704 = vcvt.s32.f32 %v2685
        %v2705 = vcvt.s32.f32 %v2686
        %v2706 = vcvt.s32.f32 %v2687
        %v2707 = vcvt.s32.f32 %v2688
        %v2708 = vcvt.s32.f32 %v2689
        %v2709 = vcvt.s32.f32 %v2690
        %v2710 = vcvt.s32.f32 %v2691
        %v2711 = vcvt.s32.f32 %v2692
        %2712 = vst [vmem:[%s265] sm:$0xff] %v2693
        %2713 = vst [vmem:[%s265 + $0x8] sm:$0xff] %v2694
        %2714 = vst [vmem:[%s265 + $0x10] sm:$0xff] %v2695
        %2715 = vst [vmem:[%s265 + $0x18] sm:$0xff] %v2696
        %2716 = vst [vmem:[%s265 + $0x20] sm:$0xff] %v2697
        %2717 = vst [vmem:[%s265 + $0x28] sm:$0xff] %v2698
        %2718 = vst [vmem:[%s265 + $0x30] sm:$0xff] %v2699
        %2719 = vst [vmem:[%s265 + $0x38] sm:$0xff] %v2700
        %2720 = vst [vmem:[%s265 + $0x40] sm:$0xff] %v2701
        %2721 = vst [vmem:[%s265 + $0x48] sm:$0xff] %v2702
        %2722 = vst [vmem:[%s265 + $0x50] sm:$0xff] %v2703
        %2723 = vst [vmem:[%s265 + $0x58] sm:$0xff] %v2704
        %2724 = vst [vmem:[%s265 + $0x60] sm:$0xff] %v2705
        %2725 = vst [vmem:[%s265 + $0x68] sm:$0xff] %v2706
        %2726 = vst [vmem:[%s265 + $0x70] sm:$0xff] %v2707
        %2727 = vst [vmem:[%s265 + $0x78] sm:$0xff] %v2708
        %2728 = vst [vmem:[%s265 + $0x80] sm:$0xff] %v2709
        %2729 = vst [vmem:[%s265 + $0x88] sm:$0xff] %v2710
        %2730 = vst [vmem:[%s265 + $0x90] sm:$0x3f] %v2711
        %p2731 = scmp.lt.s32.totalorder %s18, 1
        %s2732 = scalar_select %p2731, %s18, 1
        %s2733 = smul.addr %s2732, 19
        %s2734 = smul.addr %s2733, 8
        %s2735 = scalar_lea.vmem %s6, %s2734
        // Predicated region
        $region49: #{kheradpisheh_forward.1} parent=43 // pred_check
          %p2736 = pneg %p167
        $region50: #{kheradpisheh_forward.1} parent=43 // pred_check_branch
          %2738 = sbr.rel (%p2736) target = $region52
        $region51: #{kheradpisheh_forward.1} parent=43 // pred_region
          _
        $region52: #{kheradpisheh_forward.1} parent=43 // pred_fallthru
          _
      $region44: #{kheradpisheh_forward.1} parent=5 // pred_fallthru
        _
      %p2739 = scmp.le.s32.totalorder 2, %s13
      // Predicated region
      $region53: #{kheradpisheh_forward.1} parent=5 // pred_check
        %p2740 = pneg %p2739
      $region54: #{kheradpisheh_forward.1} parent=5 // pred_check_branch
        %2742 = sbr.rel (%p2740) target = $region56
      $region55: #{kheradpisheh_forward.1} parent=5 // pred_region
        %s2743 = ssub.s32 %s13, 2
        // Predicated region
        $region57: #{kheradpisheh_forward.1} parent=55 // pred_check
          %p2744 = pneg %p173
        $region58: #{kheradpisheh_forward.1} parent=55 // pred_check_branch
          %2746 = sbr.rel (%p2744) target = $region60
        $region59: #{kheradpisheh_forward.1} parent=55 // pred_region
          %p2747 = scmp.lt.s32.totalorder %s19, 1
          %s2748 = scalar_select %p2747, %s19, 1
          %s2749 = smul.addr %s2748, 19
          %s2750 = smul.addr %s2749, 8
          %s2751 = scalar_lea.vmem %s6, %s2750
        $region60: #{kheradpisheh_forward.1} parent=55 // pred_fallthru
          _
      $region56: #{kheradpisheh_forward.1} parent=5 // pred_fallthru
        _
    $region6: #{kheradpisheh_forward.1} parent=1 // loop_footer
      %s17 = sadd.s32 1, %s13
    $region7: #{kheradpisheh_forward.1} parent=1 // loop_footer_branch
      %12 = sbr.rel target = $region3
    $region8: #{kheradpisheh_forward.1} parent=1 // loop_exit
      _
    %2752 = vsyncpa [#allocation5], 1
    %s2753 = scalar_lea.sflag [#allocation5], 1
    %2754 = vsyncpa %s2753, 1

</llo_original>
